<compile_context>
chip_gen: v7x
topology: tpu7x:2x2x1
jax: 0.10.0
libtpu: 0.0.40
codegen_flags: <defaults>
</compile_context>

<pallas_src>
import functools

import jax
import jax.numpy as jnp
from jax.experimental import pallas as pl
from jax.experimental.pallas import tpu as pltpu


# ----------------------------------------------------------------------------
# Fused Pallas kernel: L stacked GRU cells (T=1) + Linear(H,1) + sigmoid head
# One grid step processes a (TM,)-row tile; weights stay VMEM-resident.
# ----------------------------------------------------------------------------
def _fused_gru_head_kernel(num_layers, hidden_size, *refs):
    """Ref layout (in order):
      x_ref:      (TM, E)     bf16  layer-0 input rows (ELMo embedding)
      h_ref:      (L, TM, H)  f32   previous hidden state, all layers
      per layer l (2 refs each, gate order r, z, n — PyTorch order):
        wih_t:    (in_l, 3H)  bf16  W_ih^T
        whh_t:    (H, 3H)     bf16  W_hh^T
      b_all:      (L, 4H)     f32   [ (b_ih+b_hh)_rz | b_ih_n | b_hh_n ]
      w_row:      (1, H)      f32   output head weight (as a row)
      b_out:      (1,)        f32   output head bias              [SMEM]
      -- outputs --
      y_ref:      (TM, 128)   f32   sigmoid(Linear(h_last)), lane-broadcast
      h_out_ref:  (L, TM, H)  f32   new hidden state
    """
    H = hidden_size
    L = num_layers
    x_ref, h_ref = refs[0], refs[1]
    w_refs = refs[2:2 + 2 * L]
    b_all_ref = refs[2 + 2 * L]
    w_row_ref = refs[3 + 2 * L]
    b_out_ref = refs[4 + 2 * L]
    y_ref = refs[5 + 2 * L]
    h_out_ref = refs[6 + 2 * L]

    layer_in_bf16 = x_ref[...]                  # (TM, E) bf16 (pre-cast)
    h_last_f32 = None
    for l in range(L):                          # static unroll over layers
        wih_ref, whh_ref = w_refs[2 * l], w_refs[2 * l + 1]
        h_prev = h_ref[l]                       # (TM, H) f32

        # MXU: bf16 inputs, f32 accumulation.
        gi = jnp.dot(layer_in_bf16, wih_ref[...],
                     preferred_element_type=jnp.float32)        # (TM, 3H)
        gh = jnp.dot(h_prev.astype(jnp.bfloat16), whh_ref[...],
                     preferred_element_type=jnp.float32)        # (TM, 3H)

        # Packed biases: 128-aligned lane slices (H is a multiple of 128).
        b_rz = b_all_ref[l:l + 1, 0:2 * H]          # (1, 2H)
        b_in = b_all_ref[l:l + 1, 2 * H:3 * H]      # (1, H)
        b_hn = b_all_ref[l:l + 1, 3 * H:4 * H]      # (1, H)

        # Gate math in f32 on the VPU/EUP (v5e-safe).
        rz = jax.nn.sigmoid(gi[:, :2 * H] + gh[:, :2 * H] + b_rz)
        r = rz[:, :H]
        z = rz[:, H:]
        n = jnp.tanh(gi[:, 2 * H:] + b_in + r * (gh[:, 2 * H:] + b_hn))
        h_new = (1.0 - z) * n + z * h_prev          # (TM, H) f32

        h_out_ref[l] = h_new
        h_last_f32 = h_new
        layer_in_bf16 = h_new.astype(jnp.bfloat16)

    # Head: VPU multiply + lane reduction (no MXU weight push), f32.
    logits = jnp.sum(h_last_f32 * w_row_ref[...], axis=-1, keepdims=True)
    logits = logits + b_out_ref[0]                  # scalar bias from SMEM
    y = jax.nn.sigmoid(logits)                      # (TM, 1)
    # Lane-dense store: broadcast across the 128-lane axis (unmasked vst);
    # the wrapper slices column 0.
    y_ref[...] = jnp.broadcast_to(y, y_ref.shape)


# ----------------------------------------------------------------------------
# Parameter construction (deterministic, PyTorch-style uniform(-k, k) init)
# ----------------------------------------------------------------------------
def init_params(key, embedding_dim, hidden_size, num_layers):
    H = hidden_size
    k = 1.0 / float(H) ** 0.5
    gru = []
    b_rows = []
    for layer in range(num_layers):
        in_dim = embedding_dim if layer == 0 else H
        key, k1, k2, k3, k4 = jax.random.split(key, 5)
        wih = jax.random.uniform(k1, (in_dim, 3 * H), jnp.float32, -k, k)
        whh = jax.random.uniform(k2, (H, 3 * H), jnp.float32, -k, k)
        bih = jax.random.uniform(k3, (3 * H,), jnp.float32, -k, k)
        bhh = jax.random.uniform(k4, (3 * H,), jnp.float32, -k, k)
        gru.append({
            # matmul weights stored pre-transposed AND in bf16 (halves the DMA)
            "wih_t": wih.astype(jnp.bfloat16),
            "whh_t": whh.astype(jnp.bfloat16),
        })
        # Packed biases: [ (b_ih+b_hh) for r,z | b_ih_n | b_hh_n ]  -> (4H,)
        b_rows.append(jnp.concatenate(
            [(bih + bhh)[:2 * H], bih[2 * H:], bhh[2 * H:]], axis=0))
    key, k1, k2 = jax.random.split(key, 3)
    out = {
        "w_row": jax.random.uniform(k1, (1, H), jnp.float32, -k, k),
        "b": jax.random.uniform(k2, (1,), jnp.float32, -k, k),
    }
    return {"gru": gru, "b_all": jnp.stack(b_rows, axis=0), "out": out}


# ----------------------------------------------------------------------------
# Forward pass (mirrors WinoClassifier.forward after the ELMo embedding)
# ----------------------------------------------------------------------------
@functools.partial(jax.jit, static_argnames=("num_layers", "block_rows"))
def wino_forward(embedded, hidden, params, *, num_layers, block_rows=8):
    """embedded: (S, E) — the ELMo representation of one sentence.
    hidden:   (L, S, H) — GRU hidden state (batch = S because of the
              unsqueeze(0) in the original forward; seq_len T = 1).
    Returns (sigmoid_output (1, S, 1), new_hidden (L, S, H))."""
    S, E = embedded.shape
    L, _, H = hidden.shape
    TM = block_rows

    # Pad the row (GRU-batch) axis to a multiple of the row tile.
    B = ((S + TM - 1) // TM) * TM
    if B != S:
        embedded = jnp.pad(embedded, ((0, B - S), (0, 0)))
        hidden = jnp.pad(hidden, ((0, 0), (0, B - S), (0, 0)))

    # Pre-cast the layer-0 activations to bf16 (halves activation DMA; the
    # reference rounds matmul inputs to bf16 anyway).
    emb_bf16 = embedded.astype(jnp.bfloat16)

    grid = (B // TM,)

    flat_inputs = [emb_bf16, hidden]
    in_specs = [
        pl.BlockSpec((TM, E), lambda i: (i, 0)),
        pl.BlockSpec((L, TM, H), lambda i: (0, i, 0)),
    ]
    for l in range(L):
        p = params["gru"][l]
        flat_inputs += [p["wih_t"], p["whh_t"]]
        # Weight index_maps return the same block for every grid step ->
        # weights stay VMEM-resident; DMA'd once, amortized over all rows.
        in_specs += [
            pl.BlockSpec(p["wih_t"].shape, lambda i: (0, 0)),
            pl.BlockSpec((H, 3 * H), lambda i: (0, 0)),
        ]
    flat_inputs += [params["b_all"], params["out"]["w_row"], params["out"]["b"]]
    in_specs += [
        pl.BlockSpec((L, 4 * H), lambda i: (0, 0)),
        pl.BlockSpec((1, H), lambda i: (0, 0)),
        pl.BlockSpec(memory_space=pltpu.SMEM),
    ]

    out_shape = (
        jax.ShapeDtypeStruct((B, 128), jnp.float32),     # lane-dense y slab
        jax.ShapeDtypeStruct((L, B, H), jnp.float32),    # new hidden state
    )
    out_specs = (
        pl.BlockSpec((TM, 128), lambda i: (i, 0)),
        pl.BlockSpec((L, TM, H), lambda i: (0, i, 0)),
    )

    # Advisory cost estimate so XLA can overlap neighboring ops.
    flops = 2 * B * 3 * H * (E + (2 * L - 1) * H) + 2 * B * H
    transcendentals = B * (3 * H * L + 1)
    bytes_accessed = (
        2 * (E * 3 * H + (2 * L - 1) * H * 3 * H)   # bf16 weights
        + L * 4 * H * 4 + (H + 1) * 4               # biases + head params
        + B * E * 2                                 # bf16 activations in
        + 2 * L * B * H * 4                         # hidden in + out
        + B * 128 * 4                               # y slab out
    )

    kernel = functools.partial(_fused_gru_head_kernel, L, H)
    y_slab, new_hidden = pl.pallas_call(
        kernel,
        grid=grid,
        out_shape=out_shape,
        in_specs=in_specs,
        out_specs=out_specs,
        compiler_params=pltpu.CompilerParams(
            # Row tiles are independent -> shard across v7x's two TensorCores.
            dimension_semantics=("parallel",)),
        cost_estimate=pl.CostEstimate(
            flops=flops, transcendentals=transcendentals,
            bytes_accessed=bytes_accessed),
    )(*flat_inputs)

    # Slice off row padding / the lane-broadcast, restore PyTorch layout.
    y = y_slab[:S, 0:1][None, ...]                   # (1, S, 1)
    return y, new_hidden[:, :S, :]


# ----------------------------------------------------------------------------
# Pure-JAX reference (same bf16-rounded matmul inputs, f32 everywhere else)
# ----------------------------------------------------------------------------
def reference_forward(embedded, hidden, params, num_layers):
    H = hidden.shape[-1]
    layer_in = embedded.astype(jnp.bfloat16).astype(jnp.float32)
    new_h = []
    for l in range(num_layers):
        p = params["gru"][l]
        wih = p["wih_t"].astype(jnp.float32)
        whh = p["whh_t"].astype(jnp.float32)
        b = params["b_all"][l]
        h_prev = hidden[l]
        gi = jnp.dot(layer_in, wih)
        gh = jnp.dot(h_prev.astype(jnp.bfloat16).astype(jnp.float32), whh)
        rz = jax.nn.sigmoid(gi[:, :2 * H] + gh[:, :2 * H] + b[:2 * H])
        r, z = rz[:, :H], rz[:, H:]
        n = jnp.tanh(gi[:, 2 * H:] + b[2 * H:3 * H]
                     + r * (gh[:, 2 * H:] + b[3 * H:]))
        h_new = (1.0 - z) * n + z * h_prev
        new_h.append(h_new)
        layer_in = h_new.astype(jnp.bfloat16).astype(jnp.float32)
    logits = jnp.sum(new_h[-1] * params["out"]["w_row"], axis=-1, keepdims=True)
    y = jax.nn.sigmoid(logits + params["out"]["b"][0])
    return y[None, ...], jnp.stack(new_h, axis=0)


# ----------------------------------------------------------------------------
# Demo
# ----------------------------------------------------------------------------
if __name__ == "__main__":
    EMBEDDING_DIM = 1024   # fixed by the module (ELMo output dim)
    HIDDEN_SIZE = 128
    NUM_LAYERS = 2         # exercises the multi-layer unrolled path
    SEQ_LEN = 16           # sentence length -> GRU "batch" after unsqueeze(0)
    BLOCK_ROWS = 8         # row tile -> grid of 2 steps, weights resident

    key = jax.random.PRNGKey(0)
    key, k_emb = jax.random.split(key)

    # Stand-in for Elmo(input)['elmo_representations'][0][0]
    embedded = jax.random.normal(k_emb, (SEQ_LEN, EMBEDDING_DIM), jnp.float32)
    # init_hidden(): zeros — broadcast to the batch the GRU actually sees.
    hidden0 = jnp.zeros((NUM_LAYERS, SEQ_LEN, HIDDEN_SIZE), jnp.float32)

    params = init_params(key, EMBEDDING_DIM, HIDDEN_SIZE, NUM_LAYERS)

    out, new_hidden = wino_forward(embedded, hidden0, params,
                                   num_layers=NUM_LAYERS,
                                   block_rows=BLOCK_ROWS)
    jax.block_until_ready((out, new_hidden))

    ref_out, ref_hidden = reference_forward(embedded, hidden0, params,
                                            NUM_LAYERS)

    assert out.shape == (1, SEQ_LEN, 1)
    assert new_hidden.shape == (NUM_LAYERS, SEQ_LEN, HIDDEN_SIZE)
    assert bool(jnp.all(jnp.isfinite(out)))
    assert bool(jnp.all((out >= 0.0) & (out <= 1.0)))
    assert bool(jnp.allclose(out, ref_out, atol=5e-3, rtol=5e-3))
    assert bool(jnp.allclose(new_hidden, ref_hidden, atol=5e-3, rtol=5e-3))

    print("KERNEL_OK")
</pallas_src>

<mosaic_0001>
module attributes {stable_mosaic.version = 11 : i64} {
  func.func @_fused_gru_head_kernel(%arg0: i32, %arg1: memref<8x1024xbf16, #tpu.memory_space<vmem>>, %arg2: memref<2x8x128xf32, #tpu.memory_space<vmem>>, %arg3: memref<1024x384xbf16, #tpu.memory_space<vmem>>, %arg4: memref<128x384xbf16, #tpu.memory_space<vmem>>, %arg5: memref<128x384xbf16, #tpu.memory_space<vmem>>, %arg6: memref<128x384xbf16, #tpu.memory_space<vmem>>, %arg7: memref<2x512xf32, #tpu.memory_space<vmem>>, %arg8: memref<1x128xf32, #tpu.memory_space<vmem>>, %arg9: memref<1xf32, #tpu.memory_space<smem>>, %arg10: memref<8x128xf32, #tpu.memory_space<vmem>>, %arg11: memref<2x8x128xf32, #tpu.memory_space<vmem>>) attributes {dimension_semantics = [#tpu.dimension_semantics<parallel>], iteration_bounds = array<i64: 2>, scalar_prefetch = 0 : i64, scratch_operands = 0 : i64, tpu.core_type = #tpu.core_type<tc>, window_params = [{transform_indices = @transform_0, window_bounds = array<i64: 8, 1024>}, {transform_indices = @transform_1, window_bounds = array<i64: 2, 8, 128>}, {pipeline_mode = #tpu.pipeline_mode<synchronous>, transform_indices = @transform_2, window_bounds = array<i64: 1024, 384>}, {pipeline_mode = #tpu.pipeline_mode<synchronous>, transform_indices = @transform_3, window_bounds = array<i64: 128, 384>}, {pipeline_mode = #tpu.pipeline_mode<synchronous>, transform_indices = @transform_4, window_bounds = array<i64: 128, 384>}, {pipeline_mode = #tpu.pipeline_mode<synchronous>, transform_indices = @transform_5, window_bounds = array<i64: 128, 384>}, {pipeline_mode = #tpu.pipeline_mode<synchronous>, transform_indices = @transform_6, window_bounds = array<i64: 2, 512>}, {pipeline_mode = #tpu.pipeline_mode<synchronous>, transform_indices = @transform_7, window_bounds = array<i64: 1, 128>}, {transform_indices = @transform_8, window_bounds = array<i64: 1>}, {transform_indices = @transform_9, window_bounds = array<i64: 8, 128>}, {transform_indices = @transform_10, window_bounds = array<i64: 2, 8, 128>}]} {
    %c0 = arith.constant 0 : index
    %c0_0 = arith.constant 0 : index
    %0 = vector.load %arg1[%c0, %c0_0] : memref<8x1024xbf16, #tpu.memory_space<vmem>>, vector<8x1024xbf16>
    %c0_1 = arith.constant 0 : index
    %c0_2 = arith.constant 0 : index
    %c0_3 = arith.constant 0 : index
    %1 = vector.load %arg2[%c0_1, %c0_2, %c0_3] : memref<2x8x128xf32, #tpu.memory_space<vmem>>, vector<1x8x128xf32>
    %2 = vector.shape_cast %1 : vector<1x8x128xf32> to vector<8x128xf32>
    %c0_4 = arith.constant 0 : index
    %c0_5 = arith.constant 0 : index
    %3 = vector.load %arg3[%c0_4, %c0_5] : memref<1024x384xbf16, #tpu.memory_space<vmem>>, vector<1024x384xbf16>
    %cst = arith.constant dense<0.000000e+00> : vector<8x384xf32>
    %4 = tpu.matmul %0, %3, %cst {dimension_numbers = #tpu.dot_dimension_numbers<[1], [0], [0], [1], [0, 0, 1, 1], [], []>} : vector<8x1024xbf16>, vector<1024x384xbf16>, vector<8x384xf32> -> vector<8x384xf32>
    %5 = arith.truncf %2 : vector<8x128xf32> to vector<8x128xbf16>
    %c0_6 = arith.constant 0 : index
    %c0_7 = arith.constant 0 : index
    %6 = vector.load %arg4[%c0_6, %c0_7] : memref<128x384xbf16, #tpu.memory_space<vmem>>, vector<128x384xbf16>
    %cst_8 = arith.constant dense<0.000000e+00> : vector<8x384xf32>
    %7 = tpu.matmul %5, %6, %cst_8 {dimension_numbers = #tpu.dot_dimension_numbers<[1], [0], [0], [1], [0, 0, 1, 1], [], []>} : vector<8x128xbf16>, vector<128x384xbf16>, vector<8x384xf32> -> vector<8x384xf32>
    %c0_9 = arith.constant 0 : index
    %c0_10 = arith.constant 0 : index
    %8 = vector.load %arg7[%c0_9, %c0_10] : memref<2x512xf32, #tpu.memory_space<vmem>>, vector<1x256xf32>
    %c0_11 = arith.constant 0 : index
    %c256 = arith.constant 256 : index
    %9 = vector.load %arg7[%c0_11, %c256] : memref<2x512xf32, #tpu.memory_space<vmem>>, vector<1x128xf32>
    %c0_12 = arith.constant 0 : index
    %c384 = arith.constant 384 : index
    %10 = vector.load %arg7[%c0_12, %c384] : memref<2x512xf32, #tpu.memory_space<vmem>>, vector<1x128xf32>
    %11 = vector.extract_strided_slice %4 {offsets = [0, 0], sizes = [8, 256], strides = [1, 1]} : vector<8x384xf32> to vector<8x256xf32>
    %12 = vector.extract_strided_slice %7 {offsets = [0, 0], sizes = [8, 256], strides = [1, 1]} : vector<8x384xf32> to vector<8x256xf32>
    %13 = arith.addf %11, %12 : vector<8x256xf32>
    %14 = vector.broadcast %8 : vector<1x256xf32> to vector<8x256xf32>
    %15 = arith.addf %13, %14 : vector<8x256xf32>
    %16 = arith.negf %15 : vector<8x256xf32>
    %17 = math.exp %16 : vector<8x256xf32>
    %cst_13 = arith.constant 1.000000e+00 : f32
    %18 = vector.broadcast %cst_13 : f32 to vector<8x256xf32>
    %19 = arith.addf %18, %17 : vector<8x256xf32>
    %20 = arith.divf %18, %19 : vector<8x256xf32>
    %21 = vector.extract_strided_slice %20 {offsets = [0, 0], sizes = [8, 128], strides = [1, 1]} : vector<8x256xf32> to vector<8x128xf32>
    %22 = vector.extract_strided_slice %20 {offsets = [0, 128], sizes = [8, 128], strides = [1, 1]} : vector<8x256xf32> to vector<8x128xf32>
    %23 = vector.extract_strided_slice %4 {offsets = [0, 256], sizes = [8, 128], strides = [1, 1]} : vector<8x384xf32> to vector<8x128xf32>
    %24 = vector.broadcast %9 : vector<1x128xf32> to vector<8x128xf32>
    %25 = arith.addf %23, %24 : vector<8x128xf32>
    %26 = vector.extract_strided_slice %7 {offsets = [0, 256], sizes = [8, 128], strides = [1, 1]} : vector<8x384xf32> to vector<8x128xf32>
    %27 = vector.broadcast %10 : vector<1x128xf32> to vector<8x128xf32>
    %28 = arith.addf %26, %27 : vector<8x128xf32>
    %29 = arith.mulf %21, %28 : vector<8x128xf32>
    %30 = arith.addf %25, %29 : vector<8x128xf32>
    %31 = math.tanh %30 : vector<8x128xf32>
    %cst_14 = arith.constant 1.000000e+00 : f32
    %32 = vector.broadcast %cst_14 : f32 to vector<8x128xf32>
    %33 = arith.subf %32, %22 : vector<8x128xf32>
    %34 = arith.mulf %33, %31 : vector<8x128xf32>
    %35 = arith.mulf %22, %2 : vector<8x128xf32>
    %36 = arith.addf %34, %35 : vector<8x128xf32>
    %c0_15 = arith.constant 0 : index
    %c0_16 = arith.constant 0 : index
    %c0_17 = arith.constant 0 : index
    %37 = vector.load %arg11[%c0_15, %c0_16, %c0_17] : memref<2x8x128xf32, #tpu.memory_space<vmem>>, vector<1x8x128xf32>
    %38 = vector.shape_cast %37 : vector<1x8x128xf32> to vector<8x128xf32>
    %39 = vector.shape_cast %36 : vector<8x128xf32> to vector<1x8x128xf32>
    tpu.vector_store %arg11[%c0_15, %c0_16, %c0_17], %39 {strides = array<i32>} : memref<2x8x128xf32, #tpu.memory_space<vmem>>, vector<1x8x128xf32>,
    %40 = arith.truncf %36 : vector<8x128xf32> to vector<8x128xbf16>
    %c1 = arith.constant 1 : index
    %c0_18 = arith.constant 0 : index
    %c0_19 = arith.constant 0 : index
    %41 = vector.load %arg2[%c1, %c0_18, %c0_19] : memref<2x8x128xf32, #tpu.memory_space<vmem>>, vector<1x8x128xf32>
    %42 = vector.shape_cast %41 : vector<1x8x128xf32> to vector<8x128xf32>
    %c0_20 = arith.constant 0 : index
    %c0_21 = arith.constant 0 : index
    %43 = vector.load %arg5[%c0_20, %c0_21] : memref<128x384xbf16, #tpu.memory_space<vmem>>, vector<128x384xbf16>
    %cst_22 = arith.constant dense<0.000000e+00> : vector<8x384xf32>
    %44 = tpu.matmul %40, %43, %cst_22 {dimension_numbers = #tpu.dot_dimension_numbers<[1], [0], [0], [1], [0, 0, 1, 1], [], []>} : vector<8x128xbf16>, vector<128x384xbf16>, vector<8x384xf32> -> vector<8x384xf32>
    %45 = arith.truncf %42 : vector<8x128xf32> to vector<8x128xbf16>
    %c0_23 = arith.constant 0 : index
    %c0_24 = arith.constant 0 : index
    %46 = vector.load %arg6[%c0_23, %c0_24] : memref<128x384xbf16, #tpu.memory_space<vmem>>, vector<128x384xbf16>
    %cst_25 = arith.constant dense<0.000000e+00> : vector<8x384xf32>
    %47 = tpu.matmul %45, %46, %cst_25 {dimension_numbers = #tpu.dot_dimension_numbers<[1], [0], [0], [1], [0, 0, 1, 1], [], []>} : vector<8x128xbf16>, vector<128x384xbf16>, vector<8x384xf32> -> vector<8x384xf32>
    %c1_26 = arith.constant 1 : index
    %c0_27 = arith.constant 0 : index
    %48 = vector.load %arg7[%c1_26, %c0_27] : memref<2x512xf32, #tpu.memory_space<vmem>>, vector<1x256xf32>
    %c1_28 = arith.constant 1 : index
    %c256_29 = arith.constant 256 : index
    %49 = vector.load %arg7[%c1_28, %c256_29] : memref<2x512xf32, #tpu.memory_space<vmem>>, vector<1x128xf32>
    %c1_30 = arith.constant 1 : index
    %c384_31 = arith.constant 384 : index
    %50 = vector.load %arg7[%c1_30, %c384_31] : memref<2x512xf32, #tpu.memory_space<vmem>>, vector<1x128xf32>
    %51 = vector.extract_strided_slice %44 {offsets = [0, 0], sizes = [8, 256], strides = [1, 1]} : vector<8x384xf32> to vector<8x256xf32>
    %52 = vector.extract_strided_slice %47 {offsets = [0, 0], sizes = [8, 256], strides = [1, 1]} : vector<8x384xf32> to vector<8x256xf32>
    %53 = arith.addf %51, %52 : vector<8x256xf32>
    %54 = vector.broadcast %48 : vector<1x256xf32> to vector<8x256xf32>
    %55 = arith.addf %53, %54 : vector<8x256xf32>
    %56 = arith.negf %55 : vector<8x256xf32>
    %57 = math.exp %56 : vector<8x256xf32>
    %cst_32 = arith.constant 1.000000e+00 : f32
    %58 = vector.broadcast %cst_32 : f32 to vector<8x256xf32>
    %59 = arith.addf %58, %57 : vector<8x256xf32>
    %60 = arith.divf %58, %59 : vector<8x256xf32>
    %61 = vector.extract_strided_slice %60 {offsets = [0, 0], sizes = [8, 128], strides = [1, 1]} : vector<8x256xf32> to vector<8x128xf32>
    %62 = vector.extract_strided_slice %60 {offsets = [0, 128], sizes = [8, 128], strides = [1, 1]} : vector<8x256xf32> to vector<8x128xf32>
    %63 = vector.extract_strided_slice %44 {offsets = [0, 256], sizes = [8, 128], strides = [1, 1]} : vector<8x384xf32> to vector<8x128xf32>
    %64 = vector.broadcast %49 : vector<1x128xf32> to vector<8x128xf32>
    %65 = arith.addf %63, %64 : vector<8x128xf32>
    %66 = vector.extract_strided_slice %47 {offsets = [0, 256], sizes = [8, 128], strides = [1, 1]} : vector<8x384xf32> to vector<8x128xf32>
    %67 = vector.broadcast %50 : vector<1x128xf32> to vector<8x128xf32>
    %68 = arith.addf %66, %67 : vector<8x128xf32>
    %69 = arith.mulf %61, %68 : vector<8x128xf32>
    %70 = arith.addf %65, %69 : vector<8x128xf32>
    %71 = math.tanh %70 : vector<8x128xf32>
    %cst_33 = arith.constant 1.000000e+00 : f32
    %72 = vector.broadcast %cst_33 : f32 to vector<8x128xf32>
    %73 = arith.subf %72, %62 : vector<8x128xf32>
    %74 = arith.mulf %73, %71 : vector<8x128xf32>
    %75 = arith.mulf %62, %42 : vector<8x128xf32>
    %76 = arith.addf %74, %75 : vector<8x128xf32>
    %c1_34 = arith.constant 1 : index
    %c0_35 = arith.constant 0 : index
    %c0_36 = arith.constant 0 : index
    %77 = vector.load %arg11[%c1_34, %c0_35, %c0_36] : memref<2x8x128xf32, #tpu.memory_space<vmem>>, vector<1x8x128xf32>
    %78 = vector.shape_cast %77 : vector<1x8x128xf32> to vector<8x128xf32>
    %79 = vector.shape_cast %76 : vector<8x128xf32> to vector<1x8x128xf32>
    tpu.vector_store %arg11[%c1_34, %c0_35, %c0_36], %79 {strides = array<i32>} : memref<2x8x128xf32, #tpu.memory_space<vmem>>, vector<1x8x128xf32>,
    %c0_37 = arith.constant 0 : index
    %c0_38 = arith.constant 0 : index
    %80 = vector.load %arg8[%c0_37, %c0_38] : memref<1x128xf32, #tpu.memory_space<vmem>>, vector<1x128xf32>
    %81 = vector.broadcast %80 : vector<1x128xf32> to vector<8x128xf32>
    %82 = arith.mulf %76, %81 : vector<8x128xf32>
    %cst_39 = arith.constant dense<0.000000e+00> : vector<8xf32>
    %83 = vector.multi_reduction <add>, %82, %cst_39 [1] : vector<8x128xf32> to vector<8xf32>
    %84 = vector.shape_cast %83 : vector<8xf32> to vector<8x1xf32>
    %c0_40 = arith.constant 0 : index
    %85 = memref.load %arg9[%c0_40] : memref<1xf32, #tpu.memory_space<smem>>
    %86 = vector.broadcast %85 : f32 to vector<8x1xf32>
    %87 = arith.addf %84, %86 : vector<8x1xf32>
    %88 = arith.negf %87 : vector<8x1xf32>
    %89 = math.exp %88 : vector<8x1xf32>
    %cst_41 = arith.constant 1.000000e+00 : f32
    %90 = vector.broadcast %cst_41 : f32 to vector<8x1xf32>
    %91 = arith.addf %90, %89 : vector<8x1xf32>
    %92 = arith.divf %90, %91 : vector<8x1xf32>
    %93 = vector.shape_cast %92 : vector<8x1xf32> to vector<8x1xf32>
    %94 = vector.broadcast %93 : vector<8x1xf32> to vector<8x128xf32>
    %c0_42 = arith.constant 0 : index
    %c0_43 = arith.constant 0 : index
    %95 = vector.load %arg10[%c0_42, %c0_43] : memref<8x128xf32, #tpu.memory_space<vmem>>, vector<8x128xf32>
    tpu.vector_store %arg10[%c0_42, %c0_43], %94 {strides = array<i32>} : memref<8x128xf32, #tpu.memory_space<vmem>>, vector<8x128xf32>,
    return
  }
  func.func @transform_0(%arg0: i32) -> (i32, i32) {
    %c0_i32 = arith.constant 0 : i32
    %c0_i32_0 = arith.constant 0 : i32
    return %arg0, %c0_i32 : i32, i32
  }
  func.func @transform_1(%arg0: i32) -> (i32, i32, i32) {
    %c0_i32 = arith.constant 0 : i32
    %c0_i32_0 = arith.constant 0 : i32
    %c0_i32_1 = arith.constant 0 : i32
    return %c0_i32, %arg0, %c0_i32_0 : i32, i32, i32
  }
  func.func @transform_2(%arg0: i32) -> (i32, i32) {
    %c0_i32 = arith.constant 0 : i32
    %c0_i32_0 = arith.constant 0 : i32
    %c0_i32_1 = arith.constant 0 : i32
    return %c0_i32, %c0_i32_0 : i32, i32
  }
  func.func @transform_3(%arg0: i32) -> (i32, i32) {
    %c0_i32 = arith.constant 0 : i32
    %c0_i32_0 = arith.constant 0 : i32
    %c0_i32_1 = arith.constant 0 : i32
    return %c0_i32, %c0_i32_0 : i32, i32
  }
  func.func @transform_4(%arg0: i32) -> (i32, i32) {
    %c0_i32 = arith.constant 0 : i32
    %c0_i32_0 = arith.constant 0 : i32
    %c0_i32_1 = arith.constant 0 : i32
    return %c0_i32, %c0_i32_0 : i32, i32
  }
  func.func @transform_5(%arg0: i32) -> (i32, i32) {
    %c0_i32 = arith.constant 0 : i32
    %c0_i32_0 = arith.constant 0 : i32
    %c0_i32_1 = arith.constant 0 : i32
    return %c0_i32, %c0_i32_0 : i32, i32
  }
  func.func @transform_6(%arg0: i32) -> (i32, i32) {
    %c0_i32 = arith.constant 0 : i32
    %c0_i32_0 = arith.constant 0 : i32
    %c0_i32_1 = arith.constant 0 : i32
    return %c0_i32, %c0_i32_0 : i32, i32
  }
  func.func @transform_7(%arg0: i32) -> (i32, i32) {
    %c0_i32 = arith.constant 0 : i32
    %c0_i32_0 = arith.constant 0 : i32
    %c0_i32_1 = arith.constant 0 : i32
    return %c0_i32, %c0_i32_0 : i32, i32
  }
  func.func @transform_8(%arg0: i32) -> i32 {
    %c0_i32 = arith.constant 0 : i32
    %c0_i32_0 = arith.constant 0 : i32
    return %c0_i32 : i32
  }
  func.func @transform_9(%arg0: i32) -> (i32, i32) {
    %c0_i32 = arith.constant 0 : i32
    %c0_i32_0 = arith.constant 0 : i32
    return %arg0, %c0_i32 : i32, i32
  }
  func.func @transform_10(%arg0: i32) -> (i32, i32, i32) {
    %c0_i32 = arith.constant 0 : i32
    %c0_i32_0 = arith.constant 0 : i32
    %c0_i32_1 = arith.constant 0 : i32
    return %c0_i32, %arg0, %c0_i32_0 : i32, i32, i32
  }
}

</mosaic_0001>

<llo_original>
// kernel: wino_forward.1
$region0: #{wino_forward.1}
  #allocation0 [shape = 'u32[]', space=smem, size = 0x4, offset = 0x4, fixed_abs, tag = 'smem constant byte address 0x4 - core index']
  #allocation1 [shape = 'u32[144,128]{1,0:T(1,128)}', space=vmem, size = 0x12000, scoped, tag = 'internal scratch']
  #allocation2 [shape = 'f32[1]{0:T(128)S(6)}', space=smem, size = 0x200, scoped, tag = 'scoped memory for wino_forward.1']
  %s0 = inlined_call_operand.vmem [shape: bf16[16,1024], index: 0, kind: input, shape index: {}]
  %s1 = inlined_call_operand.hbm [shape: f32[2,16,128], index: 1, kind: input, shape index: {}]
  %s2 = inlined_call_operand.hbm [shape: bf16[1024,384], index: 2, kind: input, shape index: {}]
  %s3 = inlined_call_operand.vmem [shape: bf16[128,384], index: 3, kind: input, shape index: {}]
  %s4 = inlined_call_operand.hbm [shape: bf16[128,384], index: 4, kind: input, shape index: {}]
  %s5 = inlined_call_operand.hbm [shape: bf16[128,384], index: 5, kind: input, shape index: {}]
  %s6 = inlined_call_operand.vmem [shape: f32[2,512], index: 6, kind: input, shape index: {}]
  %s7 = inlined_call_operand.vmem [shape: f32[1,128], index: 7, kind: input, shape index: {}]
  %s8 = inlined_call_operand.<no memory space> [shape: f32[1], index: 8, kind: input, shape index: {}]
  %s9 = inlined_call_operand.vmem [shape: f32[16,128], index: 9, kind: output, shape index: {0}]
  %s10 = inlined_call_operand.hbm [shape: f32[2,16,128], index: 10, kind: output, shape index: {1}]
  %11 = xla_tuple %s9, %s10
  %s12 = sld [smem:[#allocation0]]
  $region93: #{wino_forward.1} parent=0
    _
  %s14 = ssub.s32 1, %s12
  %s15 = scalar_select 0, %s14, %s12
  %16 = sst [smem:[#allocation2]] %s8
  $region1: #{wino_forward.1} parent=0
    #allocation3 [shape = 'u8[16384]{0}', space=vmem, size = 0x4000, scoped, tag = 'input window, operand 1']
    #allocation4 [shape = 's32[2]{0}', space=sflag, size = 0x8, scoped, tag = 'scoped memory for wino_forward.1']
    #allocation5 [shape = 's32[2]{0}', space=sflag, size = 0x8, scoped, tag = 'scoped memory for wino_forward.1']
    #allocation6 [shape = 'u8[786432]{0}', space=vmem, size = 0xc0000, scoped, tag = 'input window, operand 2, single buffered']
    #allocation7 [shape = 's32[1]{0}', space=sflag, size = 0x4, scoped, tag = 'scoped memory for wino_forward.1']
    #allocation8 [shape = 'u8[98304]{0}', space=vmem, size = 0x18000, scoped, tag = 'input window, operand 4, single buffered']
    #allocation9 [shape = 'u8[98304]{0}', space=vmem, size = 0x18000, scoped, tag = 'input window, operand 5, single buffered']
    #allocation10 [shape = 's32[1]{0}', space=sflag, size = 0x4, scoped, tag = 'scoped memory for wino_forward.1']
    #allocation11 [shape = 'u8[16384]{0}', space=vmem, size = 0x4000, scoped, tag = 'output window, operand 1']
    %17 = vsyncpa [#allocation4], 0
    %s18 = scalar_lea.sflag [#allocation4], 1
    %19 = vsyncpa %s18, 0
    %20 = vsyncpa [#allocation7], 0
    %21 = vsyncpa [#allocation10], 0
    %22 = vsyncpa [#allocation5], 0
    %s23 = scalar_lea.sflag [#allocation5], 1
    %24 = vsyncpa %s23, 0
    loop: start=0, step=1, limit=4
    $region2: #{wino_forward.1} parent=1 // loop_pre_header
      _
    $region3: #{wino_forward.1} parent=1 // loop_header
      %s26 = sphi 0, %s30
      %p27 = scmp.ge.s32.totalorder %s26, 4
      %s36 = sphi 0, %s38
      %s39 = sphi 0, %s36
      %s40 = sphi 0, %s39
      %s56 = sphi 0, %s40
      %s62 = sphi 0, %s64
      %s65 = sphi 0, %s62
      %s66 = sphi 0, %s65
      %s82 = sphi 0, %s66
      %s86 = sphi 0, %s86
      %s88 = sphi 0, %s86
      %s89 = sphi 0, %s88
      %s103 = sphi 0, %s89
      %s107 = sphi 0, %s107
      %s109 = sphi 0, %s107
      %s110 = sphi 0, %s109
      %s124 = sphi 0, %s110
      %s128 = sphi 0, %s128
      %s130 = sphi 0, %s128
      %s131 = sphi 0, %s130
      %s145 = sphi 0, %s131
      %s149 = sphi 0, %s149
      %s151 = sphi 0, %s149
      %s152 = sphi 0, %s151
      %s166 = sphi 0, %s152
      %s170 = sphi 0, %s170
      %s172 = sphi 0, %s170
      %s173 = sphi 0, %s172
      %s187 = sphi 0, %s173
      %s191 = sphi 0, %s191
      %s193 = sphi 0, %s191
      %s194 = sphi 0, %s193
      %s208 = sphi 0, %s194
      %s212 = sphi 0, %s212
      %s214 = sphi 0, %s212
      %s215 = sphi 0, %s214
      %s229 = sphi 0, %s215
      %s235 = sphi 0, %s237
      %s238 = sphi 0, %s235
      %s239 = sphi 0, %s238
      %s255 = sphi 0, %s239
      %s261 = sphi 0, %s263
      %s264 = sphi 0, %s261
      %s265 = sphi 0, %s264
      %s281 = sphi 0, %s265
    $region4: #{wino_forward.1} parent=1 // loop_header_branch
      %29 = sbr.rel (%p27) target = $region8
    $region5: #{wino_forward.1} parent=1 // loop_body
      %s31 = ssub.s32 %s26, 1
      %s32 = ssub.s32 %s26, 2
      %s33 = sadd.s32 %s26, 1
      %s34 = ssub.s32 %s26, %s33
      %p35 = scmp.eq.s32.totalorder %s34, 0
      %s37 = sadd.s32 %s36, 1
      %s38 = scalar_select %p35, %s36, %s37
      %p41 = pneg %p35
      %p42 = scmp.eq.s32.totalorder %s26, 1
      %p43 = por %p41, %p42
      %p44 = scmp.ne.s32.totalorder %s36, %s39
      %p45 = scmp.eq.s32.totalorder %s26, 0
      %p46 = por %p44, %p45
      %p47 = scmp.ne.s32.totalorder %s36, %s39
      %p48 = scmp.eq.s32.totalorder %s31, 1
      %p49 = por %p47, %p48
      %p50 = scmp.ne.s32.totalorder %s39, %s40
      %p51 = scmp.eq.s32.totalorder %s31, 0
      %p52 = por %p50, %p51
      %p53 = scmp.ne.s32.totalorder %s39, %s40
      %p54 = scmp.eq.s32.totalorder %s32, 1
      %p55 = por %p53, %p54
      %p57 = scmp.ne.s32.totalorder %s40, %s56
      %p58 = scmp.eq.s32.totalorder %s32, 0
      %p59 = por %p57, %p58
      %s60 = ssub.s32 %s26, %s33
      %p61 = scmp.eq.s32.totalorder %s60, 0
      %s63 = sadd.s32 %s62, 1
      %s64 = scalar_select %p61, %s62, %s63
      %p67 = pneg %p61
      %p68 = scmp.eq.s32.totalorder %s26, 1
      %p69 = por %p67, %p68
      %p70 = scmp.ne.s32.totalorder %s62, %s65
      %p71 = scmp.eq.s32.totalorder %s26, 0
      %p72 = por %p70, %p71
      %p73 = scmp.ne.s32.totalorder %s62, %s65
      %p74 = scmp.eq.s32.totalorder %s31, 1
      %p75 = por %p73, %p74
      %p76 = scmp.ne.s32.totalorder %s65, %s66
      %p77 = scmp.eq.s32.totalorder %s31, 0
      %p78 = por %p76, %p77
      %p79 = scmp.ne.s32.totalorder %s65, %s66
      %p80 = scmp.eq.s32.totalorder %s32, 1
      %p81 = por %p79, %p80
      %p83 = scmp.ne.s32.totalorder %s66, %s82
      %p84 = scmp.eq.s32.totalorder %s32, 0
      %p85 = por %p83, %p84
      %s87 = sadd.s32 %s86, 1
      %p90 = scmp.eq.s32.totalorder %s26, 1
      %p91 = scmp.ne.s32.totalorder %s86, %s88
      %p92 = scmp.eq.s32.totalorder %s26, 0
      %p93 = por %p91, %p92
      %p94 = scmp.ne.s32.totalorder %s86, %s88
      %p95 = scmp.eq.s32.totalorder %s31, 1
      %p96 = por %p94, %p95
      %p97 = scmp.ne.s32.totalorder %s88, %s89
      %p98 = scmp.eq.s32.totalorder %s31, 0
      %p99 = por %p97, %p98
      %p100 = scmp.ne.s32.totalorder %s88, %s89
      %p101 = scmp.eq.s32.totalorder %s32, 1
      %p102 = por %p100, %p101
      %p104 = scmp.ne.s32.totalorder %s89, %s103
      %p105 = scmp.eq.s32.totalorder %s32, 0
      %p106 = por %p104, %p105
      %s108 = sadd.s32 %s107, 1
      %p111 = scmp.eq.s32.totalorder %s26, 1
      %p112 = scmp.ne.s32.totalorder %s107, %s109
      %p113 = scmp.eq.s32.totalorder %s26, 0
      %p114 = por %p112, %p113
      %p115 = scmp.ne.s32.totalorder %s107, %s109
      %p116 = scmp.eq.s32.totalorder %s31, 1
      %p117 = por %p115, %p116
      %p118 = scmp.ne.s32.totalorder %s109, %s110
      %p119 = scmp.eq.s32.totalorder %s31, 0
      %p120 = por %p118, %p119
      %p121 = scmp.ne.s32.totalorder %s109, %s110
      %p122 = scmp.eq.s32.totalorder %s32, 1
      %p123 = por %p121, %p122
      %p125 = scmp.ne.s32.totalorder %s110, %s124
      %p126 = scmp.eq.s32.totalorder %s32, 0
      %p127 = por %p125, %p126
      %s129 = sadd.s32 %s128, 1
      %p132 = scmp.eq.s32.totalorder %s26, 1
      %p133 = scmp.ne.s32.totalorder %s128, %s130
      %p134 = scmp.eq.s32.totalorder %s26, 0
      %p135 = por %p133, %p134
      %p136 = scmp.ne.s32.totalorder %s128, %s130
      %p137 = scmp.eq.s32.totalorder %s31, 1
      %p138 = por %p136, %p137
      %p139 = scmp.ne.s32.totalorder %s130, %s131
      %p140 = scmp.eq.s32.totalorder %s31, 0
      %p141 = por %p139, %p140
      %p142 = scmp.ne.s32.totalorder %s130, %s131
      %p143 = scmp.eq.s32.totalorder %s32, 1
      %p144 = por %p142, %p143
      %p146 = scmp.ne.s32.totalorder %s131, %s145
      %p147 = scmp.eq.s32.totalorder %s32, 0
      %p148 = por %p146, %p147
      %s150 = sadd.s32 %s149, 1
      %p153 = scmp.eq.s32.totalorder %s26, 1
      %p154 = scmp.ne.s32.totalorder %s149, %s151
      %p155 = scmp.eq.s32.totalorder %s26, 0
      %p156 = por %p154, %p155
      %p157 = scmp.ne.s32.totalorder %s149, %s151
      %p158 = scmp.eq.s32.totalorder %s31, 1
      %p159 = por %p157, %p158
      %p160 = scmp.ne.s32.totalorder %s151, %s152
      %p161 = scmp.eq.s32.totalorder %s31, 0
      %p162 = por %p160, %p161
      %p163 = scmp.ne.s32.totalorder %s151, %s152
      %p164 = scmp.eq.s32.totalorder %s32, 1
      %p165 = por %p163, %p164
      %p167 = scmp.ne.s32.totalorder %s152, %s166
      %p168 = scmp.eq.s32.totalorder %s32, 0
      %p169 = por %p167, %p168
      %s171 = sadd.s32 %s170, 1
      %p174 = scmp.eq.s32.totalorder %s26, 1
      %p175 = scmp.ne.s32.totalorder %s170, %s172
      %p176 = scmp.eq.s32.totalorder %s26, 0
      %p177 = por %p175, %p176
      %p178 = scmp.ne.s32.totalorder %s170, %s172
      %p179 = scmp.eq.s32.totalorder %s31, 1
      %p180 = por %p178, %p179
      %p181 = scmp.ne.s32.totalorder %s172, %s173
      %p182 = scmp.eq.s32.totalorder %s31, 0
      %p183 = por %p181, %p182
      %p184 = scmp.ne.s32.totalorder %s172, %s173
      %p185 = scmp.eq.s32.totalorder %s32, 1
      %p186 = por %p184, %p185
      %p188 = scmp.ne.s32.totalorder %s173, %s187
      %p189 = scmp.eq.s32.totalorder %s32, 0
      %p190 = por %p188, %p189
      %s192 = sadd.s32 %s191, 1
      %p195 = scmp.eq.s32.totalorder %s26, 1
      %p196 = scmp.ne.s32.totalorder %s191, %s193
      %p197 = scmp.eq.s32.totalorder %s26, 0
      %p198 = por %p196, %p197
      %p199 = scmp.ne.s32.totalorder %s191, %s193
      %p200 = scmp.eq.s32.totalorder %s31, 1
      %p201 = por %p199, %p200
      %p202 = scmp.ne.s32.totalorder %s193, %s194
      %p203 = scmp.eq.s32.totalorder %s31, 0
      %p204 = por %p202, %p203
      %p205 = scmp.ne.s32.totalorder %s193, %s194
      %p206 = scmp.eq.s32.totalorder %s32, 1
      %p207 = por %p205, %p206
      %p209 = scmp.ne.s32.totalorder %s194, %s208
      %p210 = scmp.eq.s32.totalorder %s32, 0
      %p211 = por %p209, %p210
      %s213 = sadd.s32 %s212, 1
      %p216 = scmp.eq.s32.totalorder %s26, 1
      %p217 = scmp.ne.s32.totalorder %s212, %s214
      %p218 = scmp.eq.s32.totalorder %s26, 0
      %p219 = por %p217, %p218
      %p220 = scmp.ne.s32.totalorder %s212, %s214
      %p221 = scmp.eq.s32.totalorder %s31, 1
      %p222 = por %p220, %p221
      %p223 = scmp.ne.s32.totalorder %s214, %s215
      %p224 = scmp.eq.s32.totalorder %s31, 0
      %p225 = por %p223, %p224
      %p226 = scmp.ne.s32.totalorder %s214, %s215
      %p227 = scmp.eq.s32.totalorder %s32, 1
      %p228 = por %p226, %p227
      %p230 = scmp.ne.s32.totalorder %s215, %s229
      %p231 = scmp.eq.s32.totalorder %s32, 0
      %p232 = por %p230, %p231
      %s233 = ssub.s32 %s26, %s33
      %p234 = scmp.eq.s32.totalorder %s233, 0
      %s236 = sadd.s32 %s235, 1
      %s237 = scalar_select %p234, %s235, %s236
      %p240 = pneg %p234
      %p241 = scmp.eq.s32.totalorder %s26, 1
      %p242 = por %p240, %p241
      %p243 = scmp.ne.s32.totalorder %s235, %s238
      %p244 = scmp.eq.s32.totalorder %s26, 0
      %p245 = por %p243, %p244
      %p246 = scmp.ne.s32.totalorder %s235, %s238
      %p247 = scmp.eq.s32.totalorder %s31, 1
      %p248 = por %p246, %p247
      %p249 = scmp.ne.s32.totalorder %s238, %s239
      %p250 = scmp.eq.s32.totalorder %s31, 0
      %p251 = por %p249, %p250
      %p252 = scmp.ne.s32.totalorder %s238, %s239
      %p253 = scmp.eq.s32.totalorder %s32, 1
      %p254 = por %p252, %p253
      %p256 = scmp.ne.s32.totalorder %s239, %s255
      %p257 = scmp.eq.s32.totalorder %s32, 0
      %p258 = por %p256, %p257
      %s259 = ssub.s32 %s26, %s33
      %p260 = scmp.eq.s32.totalorder %s259, 0
      %s262 = sadd.s32 %s261, 1
      %s263 = scalar_select %p260, %s261, %s262
      %p266 = pneg %p260
      %p267 = scmp.eq.s32.totalorder %s26, 1
      %p268 = por %p266, %p267
      %p269 = scmp.ne.s32.totalorder %s261, %s264
      %p270 = scmp.eq.s32.totalorder %s26, 0
      %p271 = por %p269, %p270
      %p272 = scmp.ne.s32.totalorder %s261, %s264
      %p273 = scmp.eq.s32.totalorder %s31, 1
      %p274 = por %p272, %p273
      %p275 = scmp.ne.s32.totalorder %s264, %s265
      %p276 = scmp.eq.s32.totalorder %s31, 0
      %p277 = por %p275, %p276
      %p278 = scmp.ne.s32.totalorder %s264, %s265
      %p279 = scmp.eq.s32.totalorder %s32, 1
      %p280 = por %p278, %p279
      %p282 = scmp.ne.s32.totalorder %s265, %s281
      %p283 = scmp.eq.s32.totalorder %s32, 0
      %p284 = por %p282, %p283
      %p285 = scmp.le.s32.totalorder 1, %s26
      %p286 = scmp.lt.s32.totalorder %s26, 3
      %p287 = pnand %p285, %p286
      %p288 = pneg %p287
      // Predicated region
      $region9: #{wino_forward.1} parent=5 // pred_check
        _
      $region10: #{wino_forward.1} parent=5 // pred_check_branch
        %290 = sbr.rel (%p287) target = $region12
      $region11: #{wino_forward.1} parent=5 // pred_region
        %s291 = ssub.s32 %s26, 1
        // Predicated region
        $region13: #{wino_forward.1} parent=11 // pred_check
          %p292 = pneg %p99
        $region14: #{wino_forward.1} parent=11 // pred_check_branch
          %294 = sbr.rel (%p292) target = $region16
        $region15: #{wino_forward.1} parent=11 // pred_region
          %s296 = ssub.s32 24576, 24576
          %297 = vsyncadd [#allocation7], %s296
          %s298 = sshll.u32 [#allocation6], 4
          %s299 = int_to_ptr.vmem [resolvable:$true] %s298
          %304 = dma.hbm_to_vmem [thread:$0]  %s2, 24576, %s299, [#allocation7], 192, 192, 12
        $region16: #{wino_forward.1} parent=11 // pred_fallthru
          _
        // Predicated region
        $region17: #{wino_forward.1} parent=11 // pred_check
          %p305 = pneg %p120
        $region18: #{wino_forward.1} parent=11 // pred_check_branch
          %307 = sbr.rel (%p305) target = $region20
        $region19: #{wino_forward.1} parent=11 // pred_region
          _
        $region20: #{wino_forward.1} parent=11 // pred_fallthru
          _
        // Predicated region
        $region21: #{wino_forward.1} parent=11 // pred_check
          %p308 = pneg %p141
        $region22: #{wino_forward.1} parent=11 // pred_check_branch
          %310 = sbr.rel (%p308) target = $region24
        $region23: #{wino_forward.1} parent=11 // pred_region
          %s312 = ssub.s32 3072, 3072
          %313 = vsyncadd [#allocation7], %s312
          %s314 = sshll.u32 [#allocation8], 4
          %s315 = int_to_ptr.vmem [resolvable:$true] %s314
          %320 = dma.hbm_to_vmem [thread:$0]  %s4, 3072, %s315, [#allocation7], 192, 192, 12
        $region24: #{wino_forward.1} parent=11 // pred_fallthru
          _
        // Predicated region
        $region25: #{wino_forward.1} parent=11 // pred_check
          %p321 = pneg %p162
        $region26: #{wino_forward.1} parent=11 // pred_check_branch
          %323 = sbr.rel (%p321) target = $region28
        $region27: #{wino_forward.1} parent=11 // pred_region
          %s325 = ssub.s32 3072, 3072
          %326 = vsyncadd [#allocation10], %s325
          %s327 = sshll.u32 [#allocation9], 4
          %s328 = int_to_ptr.vmem [resolvable:$true] %s327
          %333 = dma.hbm_to_vmem [thread:$0]  %s5, 3072, %s328, [#allocation10], 192, 192, 12
        $region28: #{wino_forward.1} parent=11 // pred_fallthru
          _
        // Predicated region
        $region29: #{wino_forward.1} parent=11 // pred_check
          %p334 = pneg %p183
        $region30: #{wino_forward.1} parent=11 // pred_check_branch
          %336 = sbr.rel (%p334) target = $region32
        $region31: #{wino_forward.1} parent=11 // pred_region
          _
        $region32: #{wino_forward.1} parent=11 // pred_fallthru
          _
        // Predicated region
        $region33: #{wino_forward.1} parent=11 // pred_check
          %p337 = pneg %p204
        $region34: #{wino_forward.1} parent=11 // pred_check_branch
          %339 = sbr.rel (%p337) target = $region36
        $region35: #{wino_forward.1} parent=11 // pred_region
          _
        $region36: #{wino_forward.1} parent=11 // pred_fallthru
          _
        // Predicated region
        $region37: #{wino_forward.1} parent=11 // pred_check
          %p340 = pneg %p225
        $region38: #{wino_forward.1} parent=11 // pred_check_branch
          %342 = sbr.rel (%p340) target = $region40
        $region39: #{wino_forward.1} parent=11 // pred_region
          _
        $region40: #{wino_forward.1} parent=11 // pred_fallthru
          _
      $region12: #{wino_forward.1} parent=5 // pred_fallthru
        _
      %p343 = scmp.lt.s32.totalorder %s26, 2
      // Predicated region
      $region41: #{wino_forward.1} parent=5 // pred_check
        %p344 = pneg %p343
      $region42: #{wino_forward.1} parent=5 // pred_check_branch
        %346 = sbr.rel (%p344) target = $region44
      $region43: #{wino_forward.1} parent=5 // pred_region
        // Predicated region
        $region45: #{wino_forward.1} parent=43 // pred_check
          %p347 = pneg %p46
        $region46: #{wino_forward.1} parent=43 // pred_check_branch
          %349 = sbr.rel (%p347) target = $region48
        $region47: #{wino_forward.1} parent=43 // pred_region
          %p350 = scmp.lt.s32.totalorder %s26, 1
          %s351 = scalar_select %p350, %s26, 1
          %s352 = smul.addr %s351, 8
          %s353 = smul.addr %s352, 4
          %s354 = scalar_lea.vmem %s0, %s353
        $region48: #{wino_forward.1} parent=43 // pred_fallthru
          _
        // Predicated region
        $region49: #{wino_forward.1} parent=43 // pred_check
          %p355 = pneg %p72
        $region50: #{wino_forward.1} parent=43 // pred_check_branch
          %357 = sbr.rel (%p355) target = $region52
        $region51: #{wino_forward.1} parent=43 // pred_region
          %s358 = sand.u32 %s62, 1
          %s359 = scalar_lea.sflag [#allocation4], %s358
          %s360 = sand.u32 %s62, 1
          %s361 = smul.addr %s360, 16
          %s362 = scalar_lea.vmem [#allocation3], %s361
          %s364 = ssub.s32 256, 256
          %365 = vsyncadd %s359, %s364
          %s366 = smul.addr %s26, 128
          %s367 = scalar_lea.hbm %s1, %s366
          %s368 = sshll.u32 %s362, 4
          %s369 = int_to_ptr.vmem [resolvable:$true] %s368
          %374 = dma.hbm_to_vmem [thread:$0]  %s367, 256, %s369, %s359, 256, 128, 8
        $region52: #{wino_forward.1} parent=43 // pred_fallthru
          _
      $region44: #{wino_forward.1} parent=5 // pred_fallthru
        _
      %p375 = scmp.le.s32.totalorder 1, %s26
      %p376 = scmp.lt.s32.totalorder %s26, 3
      %p377 = pnand %p375, %p376
      %p378 = pneg %p377
      // Predicated region
      $region53: #{wino_forward.1} parent=5 // pred_check
        _
      $region54: #{wino_forward.1} parent=5 // pred_check_branch
        %380 = sbr.rel (%p377) target = $region56
      $region55: #{wino_forward.1} parent=5 // pred_region
        %s381 = ssub.s32 %s26, 1
        %s382 = sand.u32 %s65, 1
        %s383 = scalar_lea.sflag [#allocation4], %s382
        %s384 = sand.u32 %s65, 1
        %s385 = smul.addr %s384, 16
        %s386 = scalar_lea.vmem [#allocation3], %s385
        // Predicated region
        $region57: #{wino_forward.1} parent=55 // pred_check
          %p387 = pneg %p78
        $region58: #{wino_forward.1} parent=55 // pred_check_branch
          %389 = sbr.rel (%p387) target = $region60
        $region59: #{wino_forward.1} parent=55 // pred_region
          %390 = dma.done %s383, 256
        $region60: #{wino_forward.1} parent=55 // pred_fallthru
          _
        // Predicated region
        $region61: #{wino_forward.1} parent=55 // pred_check
          %p391 = pneg %p99
        $region62: #{wino_forward.1} parent=55 // pred_check_branch
          %393 = sbr.rel (%p391) target = $region64
        $region63: #{wino_forward.1} parent=55 // pred_region
          %394 = dma.done [#allocation7], 24576
        $region64: #{wino_forward.1} parent=55 // pred_fallthru
          _
        // Predicated region
        $region65: #{wino_forward.1} parent=55 // pred_check
          %p395 = pneg %p141
        $region66: #{wino_forward.1} parent=55 // pred_check_branch
          %397 = sbr.rel (%p395) target = $region68
        $region67: #{wino_forward.1} parent=55 // pred_region
          %398 = dma.done [#allocation7], 3072
        $region68: #{wino_forward.1} parent=55 // pred_fallthru
          _
        // Predicated region
        $region69: #{wino_forward.1} parent=55 // pred_check
          %p399 = pneg %p162
        $region70: #{wino_forward.1} parent=55 // pred_check_branch
          %401 = sbr.rel (%p399) target = $region72
        $region71: #{wino_forward.1} parent=55 // pred_region
          %402 = dma.done [#allocation10], 3072
        $region72: #{wino_forward.1} parent=55 // pred_fallthru
          _
        %p403 = scmp.lt.s32.totalorder %s31, 1
        %s404 = scalar_select %p403, %s31, 1
        %s405 = smul.addr %s404, 8
        %s406 = smul.addr %s405, 4
        %s407 = scalar_lea.vmem %s0, %s406
        %p408 = pneg %p52
        %p409 = pneg %p49
        %s410 = sand.u32 %s65, 1
        %s411 = scalar_lea.sflag [#allocation4], %s410
        %s412 = sand.u32 %s65, 1
        %s413 = smul.addr %s412, 16
        %s414 = scalar_lea.vmem [#allocation3], %s413
        %p415 = pneg %p78
        %p416 = pneg %p75
        %p417 = pneg %p99
        %p418 = pneg %p96
        %p419 = pneg %p120
        %p420 = pneg %p117
        %p421 = pneg %p141
        %p422 = pneg %p138
        %p423 = pneg %p162
        %p424 = pneg %p159
        %p425 = pneg %p183
        %p426 = pneg %p180
        %p427 = pneg %p204
        %p428 = pneg %p201
        %p429 = pneg %p225
        %p430 = pneg %p222
        %p431 = pneg %p251
        %p432 = pneg %p248
        %p433 = scmp.lt.s32.totalorder %s31, 1
        %s434 = scalar_select %p433, %s31, 1
        %s435 = smul.addr %s434, 8
        %s436 = scalar_lea.vmem %s9, %s435
        %p437 = pneg %p277
        %p438 = pneg %p274
        %s439 = sand.u32 %s264, 1
        %s440 = scalar_lea.sflag [#allocation5], %s439
        %s441 = sand.u32 %s264, 1
        %s442 = smul.addr %s441, 16
        %s443 = scalar_lea.vmem [#allocation11], %s442
        %p444 = scmp.lt.s32.totalorder %s31, 1
        %s445 = scalar_select %p444, %s31, 1
        %s446 = smul.addr %s445, 8
        %s447 = smul.addr %s446, 4
        %s448 = scalar_lea.vmem %s0, %s447
        %p449 = scmp.lt.s32.totalorder %s31, 1
        %s450 = scalar_select %p449, %s31, 1
        %s451 = smul.addr %s450, 8
        %s452 = scalar_lea.vmem %s9, %s451
        %v454 = vld [vmem:[%s448] sm:$0xff]
        %v455 = vld [vmem:[%s448 + $0x8] sm:$0xff]
        %v456 = vld [vmem:[%s448 + $0x10] sm:$0xff]
        %v457 = vld [vmem:[%s448 + $0x18] sm:$0xff]
        %v458 = vld [vmem:[%s386] sm:$0xff]
        %v459 = vld [vmem:[#allocation6] sm:$0xff]
        %v460 = vld [vmem:[#allocation6 + $0x8] sm:$0xf]
        %v461 = vld [vmem:[#allocation6 + $0xc] sm:$0xff]
        %v462 = vld [vmem:[#allocation6 + $0x14] sm:$0xf]
        %v463 = vld [vmem:[#allocation6 + $0x18] sm:$0xff]
        %v464 = vld [vmem:[#allocation6 + $0x20] sm:$0xf]
        %v465 = vld [vmem:[#allocation6 + $0x24] sm:$0xff]
        %v466 = vld [vmem:[#allocation6 + $0x2c] sm:$0xf]
        %v467 = vld [vmem:[#allocation6 + $0x30] sm:$0xff]
        %v468 = vld [vmem:[#allocation6 + $0x38] sm:$0xf]
        %v469 = vld [vmem:[#allocation6 + $0x3c] sm:$0xff]
        %v470 = vld [vmem:[#allocation6 + $0x44] sm:$0xf]
        %v471 = vld [vmem:[#allocation6 + $0x48] sm:$0xff]
        %v472 = vld [vmem:[#allocation6 + $0x50] sm:$0xf]
        %v473 = vld [vmem:[#allocation6 + $0x54] sm:$0xff]
        %v474 = vld [vmem:[#allocation6 + $0x5c] sm:$0xf]
        %v475 = vld [vmem:[#allocation6 + $0x60] sm:$0xff]
        %v476 = vld [vmem:[#allocation6 + $0x68] sm:$0xf]
        %v477 = vld [vmem:[#allocation6 + $0x6c] sm:$0xff]
        %v478 = vld [vmem:[#allocation6 + $0x74] sm:$0xf]
        %v479 = vld [vmem:[#allocation6 + $0x78] sm:$0xff]
        %v480 = vld [vmem:[#allocation6 + $0x80] sm:$0xf]
        %v481 = vld [vmem:[#allocation6 + $0x84] sm:$0xff]
        %v482 = vld [vmem:[#allocation6 + $0x8c] sm:$0xf]
        %v483 = vld [vmem:[#allocation6 + $0x90] sm:$0xff]
        %v484 = vld [vmem:[#allocation6 + $0x98] sm:$0xf]
        %v485 = vld [vmem:[#allocation6 + $0x9c] sm:$0xff]
        %v486 = vld [vmem:[#allocation6 + $0xa4] sm:$0xf]
        %v487 = vld [vmem:[#allocation6 + $0xa8] sm:$0xff]
        %v488 = vld [vmem:[#allocation6 + $0xb0] sm:$0xf]
        %v489 = vld [vmem:[#allocation6 + $0xb4] sm:$0xff]
        %v490 = vld [vmem:[#allocation6 + $0xbc] sm:$0xf]
        %v491 = vld [vmem:[#allocation6 + $0xc0] sm:$0xff]
        %v492 = vld [vmem:[#allocation6 + $0xc8] sm:$0xf]
        %v493 = vld [vmem:[#allocation6 + $0xcc] sm:$0xff]
        %v494 = vld [vmem:[#allocation6 + $0xd4] sm:$0xf]
        %v495 = vld [vmem:[#allocation6 + $0xd8] sm:$0xff]
        %v496 = vld [vmem:[#allocation6 + $0xe0] sm:$0xf]
        %v497 = vld [vmem:[#allocation6 + $0xe4] sm:$0xff]
        %v498 = vld [vmem:[#allocation6 + $0xec] sm:$0xf]
        %v499 = vld [vmem:[#allocation6 + $0xf0] sm:$0xff]
        %v500 = vld [vmem:[#allocation6 + $0xf8] sm:$0xf]
        %v501 = vld [vmem:[#allocation6 + $0xfc] sm:$0xff]
        %v502 = vld [vmem:[#allocation6 + $0x104] sm:$0xf]
        %v503 = vld [vmem:[#allocation6 + $0x108] sm:$0xff]
        %v504 = vld [vmem:[#allocation6 + $0x110] sm:$0xf]
        %v505 = vld [vmem:[#allocation6 + $0x114] sm:$0xff]
        %v506 = vld [vmem:[#allocation6 + $0x11c] sm:$0xf]
        %v507 = vld [vmem:[#allocation6 + $0x120] sm:$0xff]
        %v508 = vld [vmem:[#allocation6 + $0x128] sm:$0xf]
        %v509 = vld [vmem:[#allocation6 + $0x12c] sm:$0xff]
        %v510 = vld [vmem:[#allocation6 + $0x134] sm:$0xf]
        %v511 = vld [vmem:[#allocation6 + $0x138] sm:$0xff]
        %v512 = vld [vmem:[#allocation6 + $0x140] sm:$0xf]
        %v513 = vld [vmem:[#allocation6 + $0x144] sm:$0xff]
        %v514 = vld [vmem:[#allocation6 + $0x14c] sm:$0xf]
        %v515 = vld [vmem:[#allocation6 + $0x150] sm:$0xff]
        %v516 = vld [vmem:[#allocation6 + $0x158] sm:$0xf]
        %v517 = vld [vmem:[#allocation6 + $0x15c] sm:$0xff]
        %v518 = vld [vmem:[#allocation6 + $0x164] sm:$0xf]
        %v519 = vld [vmem:[#allocation6 + $0x168] sm:$0xff]
        %v520 = vld [vmem:[#allocation6 + $0x170] sm:$0xf]
        %v521 = vld [vmem:[#allocation6 + $0x174] sm:$0xff]
        %v522 = vld [vmem:[#allocation6 + $0x17c] sm:$0xf]
        %v523 = vld [vmem:[#allocation6 + $0x180] sm:$0xff]
        %v524 = vld [vmem:[#allocation6 + $0x188] sm:$0xf]
        %v525 = vld [vmem:[#allocation6 + $0x18c] sm:$0xff]
        %v526 = vld [vmem:[#allocation6 + $0x194] sm:$0xf]
        %v527 = vld [vmem:[#allocation6 + $0x198] sm:$0xff]
        %v528 = vld [vmem:[#allocation6 + $0x1a0] sm:$0xf]
        %v529 = vld [vmem:[#allocation6 + $0x1a4] sm:$0xff]
        %v530 = vld [vmem:[#allocation6 + $0x1ac] sm:$0xf]
        %v531 = vld [vmem:[#allocation6 + $0x1b0] sm:$0xff]
        %v532 = vld [vmem:[#allocation6 + $0x1b8] sm:$0xf]
        %v533 = vld [vmem:[#allocation6 + $0x1bc] sm:$0xff]
        %v534 = vld [vmem:[#allocation6 + $0x1c4] sm:$0xf]
        %v535 = vld [vmem:[#allocation6 + $0x1c8] sm:$0xff]
        %v536 = vld [vmem:[#allocation6 + $0x1d0] sm:$0xf]
        %v537 = vld [vmem:[#allocation6 + $0x1d4] sm:$0xff]
        %v538 = vld [vmem:[#allocation6 + $0x1dc] sm:$0xf]
        %v539 = vld [vmem:[#allocation6 + $0x1e0] sm:$0xff]
        %v540 = vld [vmem:[#allocation6 + $0x1e8] sm:$0xf]
        %v541 = vld [vmem:[#allocation6 + $0x1ec] sm:$0xff]
        %v542 = vld [vmem:[#allocation6 + $0x1f4] sm:$0xf]
        %v543 = vld [vmem:[#allocation6 + $0x1f8] sm:$0xff]
        %v544 = vld [vmem:[#allocation6 + $0x200] sm:$0xf]
        %v545 = vld [vmem:[#allocation6 + $0x204] sm:$0xff]
        %v546 = vld [vmem:[#allocation6 + $0x20c] sm:$0xf]
        %v547 = vld [vmem:[#allocation6 + $0x210] sm:$0xff]
        %v548 = vld [vmem:[#allocation6 + $0x218] sm:$0xf]
        %v549 = vld [vmem:[#allocation6 + $0x21c] sm:$0xff]
        %v550 = vld [vmem:[#allocation6 + $0x224] sm:$0xf]
        %v551 = vld [vmem:[#allocation6 + $0x228] sm:$0xff]
        %v552 = vld [vmem:[#allocation6 + $0x230] sm:$0xf]
        %v553 = vld [vmem:[#allocation6 + $0x234] sm:$0xff]
        %v554 = vld [vmem:[#allocation6 + $0x23c] sm:$0xf]
        %v555 = vld [vmem:[#allocation6 + $0x240] sm:$0xff]
        %v556 = vld [vmem:[#allocation6 + $0x248] sm:$0xf]
        %v557 = vld [vmem:[#allocation6 + $0x24c] sm:$0xff]
        %v558 = vld [vmem:[#allocation6 + $0x254] sm:$0xf]
        %v559 = vld [vmem:[#allocation6 + $0x258] sm:$0xff]
        %v560 = vld [vmem:[#allocation6 + $0x260] sm:$0xf]
        %v561 = vld [vmem:[#allocation6 + $0x264] sm:$0xff]
        %v562 = vld [vmem:[#allocation6 + $0x26c] sm:$0xf]
        %v563 = vld [vmem:[#allocation6 + $0x270] sm:$0xff]
        %v564 = vld [vmem:[#allocation6 + $0x278] sm:$0xf]
        %v565 = vld [vmem:[#allocation6 + $0x27c] sm:$0xff]
        %v566 = vld [vmem:[#allocation6 + $0x284] sm:$0xf]
        %v567 = vld [vmem:[#allocation6 + $0x288] sm:$0xff]
        %v568 = vld [vmem:[#allocation6 + $0x290] sm:$0xf]
        %v569 = vld [vmem:[#allocation6 + $0x294] sm:$0xff]
        %v570 = vld [vmem:[#allocation6 + $0x29c] sm:$0xf]
        %v571 = vld [vmem:[#allocation6 + $0x2a0] sm:$0xff]
        %v572 = vld [vmem:[#allocation6 + $0x2a8] sm:$0xf]
        %v573 = vld [vmem:[#allocation6 + $0x2ac] sm:$0xff]
        %v574 = vld [vmem:[#allocation6 + $0x2b4] sm:$0xf]
        %v575 = vld [vmem:[#allocation6 + $0x2b8] sm:$0xff]
        %v576 = vld [vmem:[#allocation6 + $0x2c0] sm:$0xf]
        %v577 = vld [vmem:[#allocation6 + $0x2c4] sm:$0xff]
        %v578 = vld [vmem:[#allocation6 + $0x2cc] sm:$0xf]
        %v579 = vld [vmem:[#allocation6 + $0x2d0] sm:$0xff]
        %v580 = vld [vmem:[#allocation6 + $0x2d8] sm:$0xf]
        %v581 = vld [vmem:[#allocation6 + $0x2dc] sm:$0xff]
        %v582 = vld [vmem:[#allocation6 + $0x2e4] sm:$0xf]
        %v583 = vld [vmem:[#allocation6 + $0x2e8] sm:$0xff]
        %v584 = vld [vmem:[#allocation6 + $0x2f0] sm:$0xf]
        %v585 = vld [vmem:[#allocation6 + $0x2f4] sm:$0xff]
        %v586 = vld [vmem:[#allocation6 + $0x2fc] sm:$0xf]
        %v587 = vld [vmem:[#allocation6 + $0x300] sm:$0xff]
        %v588 = vld [vmem:[#allocation6 + $0x308] sm:$0xf]
        %v589 = vld [vmem:[#allocation6 + $0x30c] sm:$0xff]
        %v590 = vld [vmem:[#allocation6 + $0x314] sm:$0xf]
        %v591 = vld [vmem:[#allocation6 + $0x318] sm:$0xff]
        %v592 = vld [vmem:[#allocation6 + $0x320] sm:$0xf]
        %v593 = vld [vmem:[#allocation6 + $0x324] sm:$0xff]
        %v594 = vld [vmem:[#allocation6 + $0x32c] sm:$0xf]
        %v595 = vld [vmem:[#allocation6 + $0x330] sm:$0xff]
        %v596 = vld [vmem:[#allocation6 + $0x338] sm:$0xf]
        %v597 = vld [vmem:[#allocation6 + $0x33c] sm:$0xff]
        %v598 = vld [vmem:[#allocation6 + $0x344] sm:$0xf]
        %v599 = vld [vmem:[#allocation6 + $0x348] sm:$0xff]
        %v600 = vld [vmem:[#allocation6 + $0x350] sm:$0xf]
        %v601 = vld [vmem:[#allocation6 + $0x354] sm:$0xff]
        %v602 = vld [vmem:[#allocation6 + $0x35c] sm:$0xf]
        %v603 = vld [vmem:[#allocation6 + $0x360] sm:$0xff]
        %v604 = vld [vmem:[#allocation6 + $0x368] sm:$0xf]
        %v605 = vld [vmem:[#allocation6 + $0x36c] sm:$0xff]
        %v606 = vld [vmem:[#allocation6 + $0x374] sm:$0xf]
        %v607 = vld [vmem:[#allocation6 + $0x378] sm:$0xff]
        %v608 = vld [vmem:[#allocation6 + $0x380] sm:$0xf]
        %v609 = vld [vmem:[#allocation6 + $0x384] sm:$0xff]
        %v610 = vld [vmem:[#allocation6 + $0x38c] sm:$0xf]
        %v611 = vld [vmem:[#allocation6 + $0x390] sm:$0xff]
        %v612 = vld [vmem:[#allocation6 + $0x398] sm:$0xf]
        %v613 = vld [vmem:[#allocation6 + $0x39c] sm:$0xff]
        %v614 = vld [vmem:[#allocation6 + $0x3a4] sm:$0xf]
        %v615 = vld [vmem:[#allocation6 + $0x3a8] sm:$0xff]
        %v616 = vld [vmem:[#allocation6 + $0x3b0] sm:$0xf]
        %v617 = vld [vmem:[#allocation6 + $0x3b4] sm:$0xff]
        %v618 = vld [vmem:[#allocation6 + $0x3bc] sm:$0xf]
        %v619 = vld [vmem:[#allocation6 + $0x3c0] sm:$0xff]
        %v620 = vld [vmem:[#allocation6 + $0x3c8] sm:$0xf]
        %v621 = vld [vmem:[#allocation6 + $0x3cc] sm:$0xff]
        %v622 = vld [vmem:[#allocation6 + $0x3d4] sm:$0xf]
        %v623 = vld [vmem:[#allocation6 + $0x3d8] sm:$0xff]
        %v624 = vld [vmem:[#allocation6 + $0x3e0] sm:$0xf]
        %v625 = vld [vmem:[#allocation6 + $0x3e4] sm:$0xff]
        %v626 = vld [vmem:[#allocation6 + $0x3ec] sm:$0xf]
        %v627 = vld [vmem:[#allocation6 + $0x3f0] sm:$0xff]
        %v628 = vld [vmem:[#allocation6 + $0x3f8] sm:$0xf]
        %v629 = vld [vmem:[#allocation6 + $0x3fc] sm:$0xff]
        %v630 = vld [vmem:[#allocation6 + $0x404] sm:$0xf]
        %v631 = vld [vmem:[#allocation6 + $0x408] sm:$0xff]
        %v632 = vld [vmem:[#allocation6 + $0x410] sm:$0xf]
        %v633 = vld [vmem:[#allocation6 + $0x414] sm:$0xff]
        %v634 = vld [vmem:[#allocation6 + $0x41c] sm:$0xf]
        %v635 = vld [vmem:[#allocation6 + $0x420] sm:$0xff]
        %v636 = vld [vmem:[#allocation6 + $0x428] sm:$0xf]
        %v637 = vld [vmem:[#allocation6 + $0x42c] sm:$0xff]
        %v638 = vld [vmem:[#allocation6 + $0x434] sm:$0xf]
        %v639 = vld [vmem:[#allocation6 + $0x438] sm:$0xff]
        %v640 = vld [vmem:[#allocation6 + $0x440] sm:$0xf]
        %v641 = vld [vmem:[#allocation6 + $0x444] sm:$0xff]
        %v642 = vld [vmem:[#allocation6 + $0x44c] sm:$0xf]
        %v643 = vld [vmem:[#allocation6 + $0x450] sm:$0xff]
        %v644 = vld [vmem:[#allocation6 + $0x458] sm:$0xf]
        %v645 = vld [vmem:[#allocation6 + $0x45c] sm:$0xff]
        %v646 = vld [vmem:[#allocation6 + $0x464] sm:$0xf]
        %v647 = vld [vmem:[#allocation6 + $0x468] sm:$0xff]
        %v648 = vld [vmem:[#allocation6 + $0x470] sm:$0xf]
        %v649 = vld [vmem:[#allocation6 + $0x474] sm:$0xff]
        %v650 = vld [vmem:[#allocation6 + $0x47c] sm:$0xf]
        %v651 = vld [vmem:[#allocation6 + $0x480] sm:$0xff]
        %v652 = vld [vmem:[#allocation6 + $0x488] sm:$0xf]
        %v653 = vld [vmem:[#allocation6 + $0x48c] sm:$0xff]
        %v654 = vld [vmem:[#allocation6 + $0x494] sm:$0xf]
        %v655 = vld [vmem:[#allocation6 + $0x498] sm:$0xff]
        %v656 = vld [vmem:[#allocation6 + $0x4a0] sm:$0xf]
        %v657 = vld [vmem:[#allocation6 + $0x4a4] sm:$0xff]
        %v658 = vld [vmem:[#allocation6 + $0x4ac] sm:$0xf]
        %v659 = vld [vmem:[#allocation6 + $0x4b0] sm:$0xff]
        %v660 = vld [vmem:[#allocation6 + $0x4b8] sm:$0xf]
        %v661 = vld [vmem:[#allocation6 + $0x4bc] sm:$0xff]
        %v662 = vld [vmem:[#allocation6 + $0x4c4] sm:$0xf]
        %v663 = vld [vmem:[#allocation6 + $0x4c8] sm:$0xff]
        %v664 = vld [vmem:[#allocation6 + $0x4d0] sm:$0xf]
        %v665 = vld [vmem:[#allocation6 + $0x4d4] sm:$0xff]
        %v666 = vld [vmem:[#allocation6 + $0x4dc] sm:$0xf]
        %v667 = vld [vmem:[#allocation6 + $0x4e0] sm:$0xff]
        %v668 = vld [vmem:[#allocation6 + $0x4e8] sm:$0xf]
        %v669 = vld [vmem:[#allocation6 + $0x4ec] sm:$0xff]
        %v670 = vld [vmem:[#allocation6 + $0x4f4] sm:$0xf]
        %v671 = vld [vmem:[#allocation6 + $0x4f8] sm:$0xff]
        %v672 = vld [vmem:[#allocation6 + $0x500] sm:$0xf]
        %v673 = vld [vmem:[#allocation6 + $0x504] sm:$0xff]
        %v674 = vld [vmem:[#allocation6 + $0x50c] sm:$0xf]
        %v675 = vld [vmem:[#allocation6 + $0x510] sm:$0xff]
        %v676 = vld [vmem:[#allocation6 + $0x518] sm:$0xf]
        %v677 = vld [vmem:[#allocation6 + $0x51c] sm:$0xff]
        %v678 = vld [vmem:[#allocation6 + $0x524] sm:$0xf]
        %v679 = vld [vmem:[#allocation6 + $0x528] sm:$0xff]
        %v680 = vld [vmem:[#allocation6 + $0x530] sm:$0xf]
        %v681 = vld [vmem:[#allocation6 + $0x534] sm:$0xff]
        %v682 = vld [vmem:[#allocation6 + $0x53c] sm:$0xf]
        %v683 = vld [vmem:[#allocation6 + $0x540] sm:$0xff]
        %v684 = vld [vmem:[#allocation6 + $0x548] sm:$0xf]
        %v685 = vld [vmem:[#allocation6 + $0x54c] sm:$0xff]
        %v686 = vld [vmem:[#allocation6 + $0x554] sm:$0xf]
        %v687 = vld [vmem:[#allocation6 + $0x558] sm:$0xff]
        %v688 = vld [vmem:[#allocation6 + $0x560] sm:$0xf]
        %v689 = vld [vmem:[#allocation6 + $0x564] sm:$0xff]
        %v690 = vld [vmem:[#allocation6 + $0x56c] sm:$0xf]
        %v691 = vld [vmem:[#allocation6 + $0x570] sm:$0xff]
        %v692 = vld [vmem:[#allocation6 + $0x578] sm:$0xf]
        %v693 = vld [vmem:[#allocation6 + $0x57c] sm:$0xff]
        %v694 = vld [vmem:[#allocation6 + $0x584] sm:$0xf]
        %v695 = vld [vmem:[#allocation6 + $0x588] sm:$0xff]
        %v696 = vld [vmem:[#allocation6 + $0x590] sm:$0xf]
        %v697 = vld [vmem:[#allocation6 + $0x594] sm:$0xff]
        %v698 = vld [vmem:[#allocation6 + $0x59c] sm:$0xf]
        %v699 = vld [vmem:[#allocation6 + $0x5a0] sm:$0xff]
        %v700 = vld [vmem:[#allocation6 + $0x5a8] sm:$0xf]
        %v701 = vld [vmem:[#allocation6 + $0x5ac] sm:$0xff]
        %v702 = vld [vmem:[#allocation6 + $0x5b4] sm:$0xf]
        %v703 = vld [vmem:[#allocation6 + $0x5b8] sm:$0xff]
        %v704 = vld [vmem:[#allocation6 + $0x5c0] sm:$0xf]
        %v705 = vld [vmem:[#allocation6 + $0x5c4] sm:$0xff]
        %v706 = vld [vmem:[#allocation6 + $0x5cc] sm:$0xf]
        %v707 = vld [vmem:[#allocation6 + $0x5d0] sm:$0xff]
        %v708 = vld [vmem:[#allocation6 + $0x5d8] sm:$0xf]
        %v709 = vld [vmem:[#allocation6 + $0x5dc] sm:$0xff]
        %v710 = vld [vmem:[#allocation6 + $0x5e4] sm:$0xf]
        %v711 = vld [vmem:[#allocation6 + $0x5e8] sm:$0xff]
        %v712 = vld [vmem:[#allocation6 + $0x5f0] sm:$0xf]
        %v713 = vld [vmem:[#allocation6 + $0x5f4] sm:$0xff]
        %v714 = vld [vmem:[#allocation6 + $0x5fc] sm:$0xf]
        %v719 = vunpack.c.l.b16 %v454
        %v720 = vunpack.c.h.b16 %v454
        %v721 = vunpack.c.l.b16 %v455
        %v722 = vunpack.c.h.b16 %v455
        %v723 = vunpack.c.l.b16 %v456
        %v724 = vunpack.c.h.b16 %v456
        %v725 = vunpack.c.l.b16 %v457
        %v726 = vunpack.c.h.b16 %v457
        %v727 = vpack.c.b16 %v719, %v719
        %v728 = vpack.c.b16 %v720, %v720
        %v729 = vpack.c.b16 %v721, %v721
        %v730 = vpack.c.b16 %v722, %v722
        %v731 = vpack.c.b16 %v723, %v723
        %v732 = vpack.c.b16 %v724, %v724
        %v733 = vpack.c.b16 %v725, %v725
        %v734 = vpack.c.b16 %v726, %v726
        %v999 = vunpack.c.l.b16 %v459
        %v1000 = vunpack.c.h.b16 %v459
        %v1001 = vunpack.c.l.b16 %v460
        %v1002 = vunpack.c.l.b16 %v461
        %v1003 = vunpack.c.h.b16 %v461
        %v1004 = vunpack.c.l.b16 %v462
        %v1005 = vunpack.c.l.b16 %v463
        %v1006 = vunpack.c.h.b16 %v463
        %v1007 = vunpack.c.l.b16 %v464
        %v1008 = vunpack.c.l.b16 %v465
        %v1009 = vunpack.c.h.b16 %v465
        %v1010 = vunpack.c.l.b16 %v466
        %v1011 = vunpack.c.l.b16 %v467
        %v1012 = vunpack.c.h.b16 %v467
        %v1013 = vunpack.c.l.b16 %v468
        %v1014 = vunpack.c.l.b16 %v469
        %v1015 = vunpack.c.h.b16 %v469
        %v1016 = vunpack.c.l.b16 %v470
        %v1017 = vunpack.c.l.b16 %v471
        %v1018 = vunpack.c.h.b16 %v471
        %v1019 = vunpack.c.l.b16 %v472
        %v1020 = vunpack.c.l.b16 %v473
        %v1021 = vunpack.c.h.b16 %v473
        %v1022 = vunpack.c.l.b16 %v474
        %v1023 = vunpack.c.l.b16 %v475
        %v1024 = vunpack.c.h.b16 %v475
        %v1025 = vunpack.c.l.b16 %v476
        %v1026 = vunpack.c.l.b16 %v477
        %v1027 = vunpack.c.h.b16 %v477
        %v1028 = vunpack.c.l.b16 %v478
        %v1029 = vunpack.c.l.b16 %v479
        %v1030 = vunpack.c.h.b16 %v479
        %v1031 = vunpack.c.l.b16 %v480
        %v1032 = vunpack.c.l.b16 %v481
        %v1033 = vunpack.c.h.b16 %v481
        %v1034 = vunpack.c.l.b16 %v482
        %v1035 = vunpack.c.l.b16 %v483
        %v1036 = vunpack.c.h.b16 %v483
        %v1037 = vunpack.c.l.b16 %v484
        %v1038 = vunpack.c.l.b16 %v485
        %v1039 = vunpack.c.h.b16 %v485
        %v1040 = vunpack.c.l.b16 %v486
        %v1041 = vunpack.c.l.b16 %v487
        %v1042 = vunpack.c.h.b16 %v487
        %v1043 = vunpack.c.l.b16 %v488
        %v1044 = vunpack.c.l.b16 %v489
        %v1045 = vunpack.c.h.b16 %v489
        %v1046 = vunpack.c.l.b16 %v490
        %v1047 = vunpack.c.l.b16 %v491
        %v1048 = vunpack.c.h.b16 %v491
        %v1049 = vunpack.c.l.b16 %v492
        %v1050 = vunpack.c.l.b16 %v493
        %v1051 = vunpack.c.h.b16 %v493
        %v1052 = vunpack.c.l.b16 %v494
        %v1053 = vunpack.c.l.b16 %v495
        %v1054 = vunpack.c.h.b16 %v495
        %v1055 = vunpack.c.l.b16 %v496
        %v1056 = vunpack.c.l.b16 %v497
        %v1057 = vunpack.c.h.b16 %v497
        %v1058 = vunpack.c.l.b16 %v498
        %v1059 = vunpack.c.l.b16 %v499
        %v1060 = vunpack.c.h.b16 %v499
        %v1061 = vunpack.c.l.b16 %v500
        %v1062 = vunpack.c.l.b16 %v501
        %v1063 = vunpack.c.h.b16 %v501
        %v1064 = vunpack.c.l.b16 %v502
        %v1065 = vunpack.c.l.b16 %v503
        %v1066 = vunpack.c.h.b16 %v503
        %v1067 = vunpack.c.l.b16 %v504
        %v1068 = vunpack.c.l.b16 %v505
        %v1069 = vunpack.c.h.b16 %v505
        %v1070 = vunpack.c.l.b16 %v506
        %v1071 = vunpack.c.l.b16 %v507
        %v1072 = vunpack.c.h.b16 %v507
        %v1073 = vunpack.c.l.b16 %v508
        %v1074 = vunpack.c.l.b16 %v509
        %v1075 = vunpack.c.h.b16 %v509
        %v1076 = vunpack.c.l.b16 %v510
        %v1077 = vunpack.c.l.b16 %v511
        %v1078 = vunpack.c.h.b16 %v511
        %v1079 = vunpack.c.l.b16 %v512
        %v1080 = vunpack.c.l.b16 %v513
        %v1081 = vunpack.c.h.b16 %v513
        %v1082 = vunpack.c.l.b16 %v514
        %v1083 = vunpack.c.l.b16 %v515
        %v1084 = vunpack.c.h.b16 %v515
        %v1085 = vunpack.c.l.b16 %v516
        %v1086 = vunpack.c.l.b16 %v517
        %v1087 = vunpack.c.h.b16 %v517
        %v1088 = vunpack.c.l.b16 %v518
        %v1089 = vunpack.c.l.b16 %v519
        %v1090 = vunpack.c.h.b16 %v519
        %v1091 = vunpack.c.l.b16 %v520
        %v1092 = vunpack.c.l.b16 %v521
        %v1093 = vunpack.c.h.b16 %v521
        %v1094 = vunpack.c.l.b16 %v522
        %v1095 = vunpack.c.l.b16 %v523
        %v1096 = vunpack.c.h.b16 %v523
        %v1097 = vunpack.c.l.b16 %v524
        %v1098 = vunpack.c.l.b16 %v525
        %v1099 = vunpack.c.h.b16 %v525
        %v1100 = vunpack.c.l.b16 %v526
        %v1101 = vunpack.c.l.b16 %v527
        %v1102 = vunpack.c.h.b16 %v527
        %v1103 = vunpack.c.l.b16 %v528
        %v1104 = vunpack.c.l.b16 %v529
        %v1105 = vunpack.c.h.b16 %v529
        %v1106 = vunpack.c.l.b16 %v530
        %v1107 = vunpack.c.l.b16 %v531
        %v1108 = vunpack.c.h.b16 %v531
        %v1109 = vunpack.c.l.b16 %v532
        %v1110 = vunpack.c.l.b16 %v533
        %v1111 = vunpack.c.h.b16 %v533
        %v1112 = vunpack.c.l.b16 %v534
        %v1113 = vunpack.c.l.b16 %v535
        %v1114 = vunpack.c.h.b16 %v535
        %v1115 = vunpack.c.l.b16 %v536
        %v1116 = vunpack.c.l.b16 %v537
        %v1117 = vunpack.c.h.b16 %v537
        %v1118 = vunpack.c.l.b16 %v538
        %v1119 = vunpack.c.l.b16 %v539
        %v1120 = vunpack.c.h.b16 %v539
        %v1121 = vunpack.c.l.b16 %v540
        %v1122 = vunpack.c.l.b16 %v541
        %v1123 = vunpack.c.h.b16 %v541
        %v1124 = vunpack.c.l.b16 %v542
        %v1125 = vunpack.c.l.b16 %v543
        %v1126 = vunpack.c.h.b16 %v543
        %v1127 = vunpack.c.l.b16 %v544
        %v1128 = vunpack.c.l.b16 %v545
        %v1129 = vunpack.c.h.b16 %v545
        %v1130 = vunpack.c.l.b16 %v546
        %v1131 = vunpack.c.l.b16 %v547
        %v1132 = vunpack.c.h.b16 %v547
        %v1133 = vunpack.c.l.b16 %v548
        %v1134 = vunpack.c.l.b16 %v549
        %v1135 = vunpack.c.h.b16 %v549
        %v1136 = vunpack.c.l.b16 %v550
        %v1137 = vunpack.c.l.b16 %v551
        %v1138 = vunpack.c.h.b16 %v551
        %v1139 = vunpack.c.l.b16 %v552
        %v1140 = vunpack.c.l.b16 %v553
        %v1141 = vunpack.c.h.b16 %v553
        %v1142 = vunpack.c.l.b16 %v554
        %v1143 = vunpack.c.l.b16 %v555
        %v1144 = vunpack.c.h.b16 %v555
        %v1145 = vunpack.c.l.b16 %v556
        %v1146 = vunpack.c.l.b16 %v557
        %v1147 = vunpack.c.h.b16 %v557
        %v1148 = vunpack.c.l.b16 %v558
        %v1149 = vunpack.c.l.b16 %v559
        %v1150 = vunpack.c.h.b16 %v559
        %v1151 = vunpack.c.l.b16 %v560
        %v1152 = vunpack.c.l.b16 %v561
        %v1153 = vunpack.c.h.b16 %v561
        %v1154 = vunpack.c.l.b16 %v562
        %v1155 = vunpack.c.l.b16 %v563
        %v1156 = vunpack.c.h.b16 %v563
        %v1157 = vunpack.c.l.b16 %v564
        %v1158 = vunpack.c.l.b16 %v565
        %v1159 = vunpack.c.h.b16 %v565
        %v1160 = vunpack.c.l.b16 %v566
        %v1161 = vunpack.c.l.b16 %v567
        %v1162 = vunpack.c.h.b16 %v567
        %v1163 = vunpack.c.l.b16 %v568
        %v1164 = vunpack.c.l.b16 %v569
        %v1165 = vunpack.c.h.b16 %v569
        %v1166 = vunpack.c.l.b16 %v570
        %v1167 = vunpack.c.l.b16 %v571
        %v1168 = vunpack.c.h.b16 %v571
        %v1169 = vunpack.c.l.b16 %v572
        %v1170 = vunpack.c.l.b16 %v573
        %v1171 = vunpack.c.h.b16 %v573
        %v1172 = vunpack.c.l.b16 %v574
        %v1173 = vunpack.c.l.b16 %v575
        %v1174 = vunpack.c.h.b16 %v575
        %v1175 = vunpack.c.l.b16 %v576
        %v1176 = vunpack.c.l.b16 %v577
        %v1177 = vunpack.c.h.b16 %v577
        %v1178 = vunpack.c.l.b16 %v578
        %v1179 = vunpack.c.l.b16 %v579
        %v1180 = vunpack.c.h.b16 %v579
        %v1181 = vunpack.c.l.b16 %v580
        %v1182 = vunpack.c.l.b16 %v581
        %v1183 = vunpack.c.h.b16 %v581
        %v1184 = vunpack.c.l.b16 %v582
        %v1185 = vunpack.c.l.b16 %v583
        %v1186 = vunpack.c.h.b16 %v583
        %v1187 = vunpack.c.l.b16 %v584
        %v1188 = vunpack.c.l.b16 %v585
        %v1189 = vunpack.c.h.b16 %v585
        %v1190 = vunpack.c.l.b16 %v586
        %v1191 = vunpack.c.l.b16 %v587
        %v1192 = vunpack.c.h.b16 %v587
        %v1193 = vunpack.c.l.b16 %v588
        %v1194 = vunpack.c.l.b16 %v589
        %v1195 = vunpack.c.h.b16 %v589
        %v1196 = vunpack.c.l.b16 %v590
        %v1197 = vunpack.c.l.b16 %v591
        %v1198 = vunpack.c.h.b16 %v591
        %v1199 = vunpack.c.l.b16 %v592
        %v1200 = vunpack.c.l.b16 %v593
        %v1201 = vunpack.c.h.b16 %v593
        %v1202 = vunpack.c.l.b16 %v594
        %v1203 = vunpack.c.l.b16 %v595
        %v1204 = vunpack.c.h.b16 %v595
        %v1205 = vunpack.c.l.b16 %v596
        %v1206 = vunpack.c.l.b16 %v597
        %v1207 = vunpack.c.h.b16 %v597
        %v1208 = vunpack.c.l.b16 %v598
        %v1209 = vunpack.c.l.b16 %v599
        %v1210 = vunpack.c.h.b16 %v599
        %v1211 = vunpack.c.l.b16 %v600
        %v1212 = vunpack.c.l.b16 %v601
        %v1213 = vunpack.c.h.b16 %v601
        %v1214 = vunpack.c.l.b16 %v602
        %v1215 = vunpack.c.l.b16 %v603
        %v1216 = vunpack.c.h.b16 %v603
        %v1217 = vunpack.c.l.b16 %v604
        %v1218 = vunpack.c.l.b16 %v605
        %v1219 = vunpack.c.h.b16 %v605
        %v1220 = vunpack.c.l.b16 %v606
        %v1221 = vunpack.c.l.b16 %v607
        %v1222 = vunpack.c.h.b16 %v607
        %v1223 = vunpack.c.l.b16 %v608
        %v1224 = vunpack.c.l.b16 %v609
        %v1225 = vunpack.c.h.b16 %v609
        %v1226 = vunpack.c.l.b16 %v610
        %v1227 = vunpack.c.l.b16 %v611
        %v1228 = vunpack.c.h.b16 %v611
        %v1229 = vunpack.c.l.b16 %v612
        %v1230 = vunpack.c.l.b16 %v613
        %v1231 = vunpack.c.h.b16 %v613
        %v1232 = vunpack.c.l.b16 %v614
        %v1233 = vunpack.c.l.b16 %v615
        %v1234 = vunpack.c.h.b16 %v615
        %v1235 = vunpack.c.l.b16 %v616
        %v1236 = vunpack.c.l.b16 %v617
        %v1237 = vunpack.c.h.b16 %v617
        %v1238 = vunpack.c.l.b16 %v618
        %v1239 = vunpack.c.l.b16 %v619
        %v1240 = vunpack.c.h.b16 %v619
        %v1241 = vunpack.c.l.b16 %v620
        %v1242 = vunpack.c.l.b16 %v621
        %v1243 = vunpack.c.h.b16 %v621
        %v1244 = vunpack.c.l.b16 %v622
        %v1245 = vunpack.c.l.b16 %v623
        %v1246 = vunpack.c.h.b16 %v623
        %v1247 = vunpack.c.l.b16 %v624
        %v1248 = vunpack.c.l.b16 %v625
        %v1249 = vunpack.c.h.b16 %v625
        %v1250 = vunpack.c.l.b16 %v626
        %v1251 = vunpack.c.l.b16 %v627
        %v1252 = vunpack.c.h.b16 %v627
        %v1253 = vunpack.c.l.b16 %v628
        %v1254 = vunpack.c.l.b16 %v629
        %v1255 = vunpack.c.h.b16 %v629
        %v1256 = vunpack.c.l.b16 %v630
        %v1257 = vunpack.c.l.b16 %v631
        %v1258 = vunpack.c.h.b16 %v631
        %v1259 = vunpack.c.l.b16 %v632
        %v1260 = vunpack.c.l.b16 %v633
        %v1261 = vunpack.c.h.b16 %v633
        %v1262 = vunpack.c.l.b16 %v634
        %v1263 = vunpack.c.l.b16 %v635
        %v1264 = vunpack.c.h.b16 %v635
        %v1265 = vunpack.c.l.b16 %v636
        %v1266 = vunpack.c.l.b16 %v637
        %v1267 = vunpack.c.h.b16 %v637
        %v1268 = vunpack.c.l.b16 %v638
        %v1269 = vunpack.c.l.b16 %v639
        %v1270 = vunpack.c.h.b16 %v639
        %v1271 = vunpack.c.l.b16 %v640
        %v1272 = vunpack.c.l.b16 %v641
        %v1273 = vunpack.c.h.b16 %v641
        %v1274 = vunpack.c.l.b16 %v642
        %v1275 = vunpack.c.l.b16 %v643
        %v1276 = vunpack.c.h.b16 %v643
        %v1277 = vunpack.c.l.b16 %v644
        %v1278 = vunpack.c.l.b16 %v645
        %v1279 = vunpack.c.h.b16 %v645
        %v1280 = vunpack.c.l.b16 %v646
        %v1281 = vunpack.c.l.b16 %v647
        %v1282 = vunpack.c.h.b16 %v647
        %v1283 = vunpack.c.l.b16 %v648
        %v1284 = vunpack.c.l.b16 %v649
        %v1285 = vunpack.c.h.b16 %v649
        %v1286 = vunpack.c.l.b16 %v650
        %v1287 = vunpack.c.l.b16 %v651
        %v1288 = vunpack.c.h.b16 %v651
        %v1289 = vunpack.c.l.b16 %v652
        %v1290 = vunpack.c.l.b16 %v653
        %v1291 = vunpack.c.h.b16 %v653
        %v1292 = vunpack.c.l.b16 %v654
        %v1293 = vunpack.c.l.b16 %v655
        %v1294 = vunpack.c.h.b16 %v655
        %v1295 = vunpack.c.l.b16 %v656
        %v1296 = vunpack.c.l.b16 %v657
        %v1297 = vunpack.c.h.b16 %v657
        %v1298 = vunpack.c.l.b16 %v658
        %v1299 = vunpack.c.l.b16 %v659
        %v1300 = vunpack.c.h.b16 %v659
        %v1301 = vunpack.c.l.b16 %v660
        %v1302 = vunpack.c.l.b16 %v661
        %v1303 = vunpack.c.h.b16 %v661
        %v1304 = vunpack.c.l.b16 %v662
        %v1305 = vunpack.c.l.b16 %v663
        %v1306 = vunpack.c.h.b16 %v663
        %v1307 = vunpack.c.l.b16 %v664
        %v1308 = vunpack.c.l.b16 %v665
        %v1309 = vunpack.c.h.b16 %v665
        %v1310 = vunpack.c.l.b16 %v666
        %v1311 = vunpack.c.l.b16 %v667
        %v1312 = vunpack.c.h.b16 %v667
        %v1313 = vunpack.c.l.b16 %v668
        %v1314 = vunpack.c.l.b16 %v669
        %v1315 = vunpack.c.h.b16 %v669
        %v1316 = vunpack.c.l.b16 %v670
        %v1317 = vunpack.c.l.b16 %v671
        %v1318 = vunpack.c.h.b16 %v671
        %v1319 = vunpack.c.l.b16 %v672
        %v1320 = vunpack.c.l.b16 %v673
        %v1321 = vunpack.c.h.b16 %v673
        %v1322 = vunpack.c.l.b16 %v674
        %v1323 = vunpack.c.l.b16 %v675
        %v1324 = vunpack.c.h.b16 %v675
        %v1325 = vunpack.c.l.b16 %v676
        %v1326 = vunpack.c.l.b16 %v677
        %v1327 = vunpack.c.h.b16 %v677
        %v1328 = vunpack.c.l.b16 %v678
        %v1329 = vunpack.c.l.b16 %v679
        %v1330 = vunpack.c.h.b16 %v679
        %v1331 = vunpack.c.l.b16 %v680
        %v1332 = vunpack.c.l.b16 %v681
        %v1333 = vunpack.c.h.b16 %v681
        %v1334 = vunpack.c.l.b16 %v682
        %v1335 = vunpack.c.l.b16 %v683
        %v1336 = vunpack.c.h.b16 %v683
        %v1337 = vunpack.c.l.b16 %v684
        %v1338 = vunpack.c.l.b16 %v685
        %v1339 = vunpack.c.h.b16 %v685
        %v1340 = vunpack.c.l.b16 %v686
        %v1341 = vunpack.c.l.b16 %v687
        %v1342 = vunpack.c.h.b16 %v687
        %v1343 = vunpack.c.l.b16 %v688
        %v1344 = vunpack.c.l.b16 %v689
        %v1345 = vunpack.c.h.b16 %v689
        %v1346 = vunpack.c.l.b16 %v690
        %v1347 = vunpack.c.l.b16 %v691
        %v1348 = vunpack.c.h.b16 %v691
        %v1349 = vunpack.c.l.b16 %v692
        %v1350 = vunpack.c.l.b16 %v693
        %v1351 = vunpack.c.h.b16 %v693
        %v1352 = vunpack.c.l.b16 %v694
        %v1353 = vunpack.c.l.b16 %v695
        %v1354 = vunpack.c.h.b16 %v695
        %v1355 = vunpack.c.l.b16 %v696
        %v1356 = vunpack.c.l.b16 %v697
        %v1357 = vunpack.c.h.b16 %v697
        %v1358 = vunpack.c.l.b16 %v698
        %v1359 = vunpack.c.l.b16 %v699
        %v1360 = vunpack.c.h.b16 %v699
        %v1361 = vunpack.c.l.b16 %v700
        %v1362 = vunpack.c.l.b16 %v701
        %v1363 = vunpack.c.h.b16 %v701
        %v1364 = vunpack.c.l.b16 %v702
        %v1365 = vunpack.c.l.b16 %v703
        %v1366 = vunpack.c.h.b16 %v703
        %v1367 = vunpack.c.l.b16 %v704
        %v1368 = vunpack.c.l.b16 %v705
        %v1369 = vunpack.c.h.b16 %v705
        %v1370 = vunpack.c.l.b16 %v706
        %v1371 = vunpack.c.l.b16 %v707
        %v1372 = vunpack.c.h.b16 %v707
        %v1373 = vunpack.c.l.b16 %v708
        %v1374 = vunpack.c.l.b16 %v709
        %v1375 = vunpack.c.h.b16 %v709
        %v1376 = vunpack.c.l.b16 %v710
        %v1377 = vunpack.c.l.b16 %v711
        %v1378 = vunpack.c.h.b16 %v711
        %v1379 = vunpack.c.l.b16 %v712
        %v1380 = vunpack.c.l.b16 %v713
        %v1381 = vunpack.c.h.b16 %v713
        %v1382 = vunpack.c.l.b16 %v714
        %v1383 = vpack.c.b16 %v1002, %v999
        %v1384 = vpack.c.b16 %v1003, %v1000
        %v1385 = vpack.c.b16 %v1004, %v1001
        %v1386 = vpack.c.b16 %v1008, %v1005
        %v1387 = vpack.c.b16 %v1009, %v1006
        %v1388 = vpack.c.b16 %v1010, %v1007
        %v1389 = vpack.c.b16 %v1014, %v1011
        %v1390 = vpack.c.b16 %v1015, %v1012
        %v1391 = vpack.c.b16 %v1016, %v1013
        %v1392 = vpack.c.b16 %v1020, %v1017
        %v1393 = vpack.c.b16 %v1021, %v1018
        %v1394 = vpack.c.b16 %v1022, %v1019
        %v1395 = vpack.c.b16 %v1026, %v1023
        %v1396 = vpack.c.b16 %v1027, %v1024
        %v1397 = vpack.c.b16 %v1028, %v1025
        %v1398 = vpack.c.b16 %v1032, %v1029
        %v1399 = vpack.c.b16 %v1033, %v1030
        %v1400 = vpack.c.b16 %v1034, %v1031
        %v1401 = vpack.c.b16 %v1038, %v1035
        %v1402 = vpack.c.b16 %v1039, %v1036
        %v1403 = vpack.c.b16 %v1040, %v1037
        %v1404 = vpack.c.b16 %v1044, %v1041
        %v1405 = vpack.c.b16 %v1045, %v1042
        %v1406 = vpack.c.b16 %v1046, %v1043
        %v1407 = vpack.c.b16 %v1050, %v1047
        %v1408 = vpack.c.b16 %v1051, %v1048
        %v1409 = vpack.c.b16 %v1052, %v1049
        %v1410 = vpack.c.b16 %v1056, %v1053
        %v1411 = vpack.c.b16 %v1057, %v1054
        %v1412 = vpack.c.b16 %v1058, %v1055
        %v1413 = vpack.c.b16 %v1062, %v1059
        %v1414 = vpack.c.b16 %v1063, %v1060
        %v1415 = vpack.c.b16 %v1064, %v1061
        %v1416 = vpack.c.b16 %v1068, %v1065
        %v1417 = vpack.c.b16 %v1069, %v1066
        %v1418 = vpack.c.b16 %v1070, %v1067
        %v1419 = vpack.c.b16 %v1074, %v1071
        %v1420 = vpack.c.b16 %v1075, %v1072
        %v1421 = vpack.c.b16 %v1076, %v1073
        %v1422 = vpack.c.b16 %v1080, %v1077
        %v1423 = vpack.c.b16 %v1081, %v1078
        %v1424 = vpack.c.b16 %v1082, %v1079
        %v1425 = vpack.c.b16 %v1086, %v1083
        %v1426 = vpack.c.b16 %v1087, %v1084
        %v1427 = vpack.c.b16 %v1088, %v1085
        %v1428 = vpack.c.b16 %v1092, %v1089
        %v1429 = vpack.c.b16 %v1093, %v1090
        %v1430 = vpack.c.b16 %v1094, %v1091
        %v1431 = vpack.c.b16 %v1098, %v1095
        %v1432 = vpack.c.b16 %v1099, %v1096
        %v1433 = vpack.c.b16 %v1100, %v1097
        %v1434 = vpack.c.b16 %v1104, %v1101
        %v1435 = vpack.c.b16 %v1105, %v1102
        %v1436 = vpack.c.b16 %v1106, %v1103
        %v1437 = vpack.c.b16 %v1110, %v1107
        %v1438 = vpack.c.b16 %v1111, %v1108
        %v1439 = vpack.c.b16 %v1112, %v1109
        %v1440 = vpack.c.b16 %v1116, %v1113
        %v1441 = vpack.c.b16 %v1117, %v1114
        %v1442 = vpack.c.b16 %v1118, %v1115
        %v1443 = vpack.c.b16 %v1122, %v1119
        %v1444 = vpack.c.b16 %v1123, %v1120
        %v1445 = vpack.c.b16 %v1124, %v1121
        %v1446 = vpack.c.b16 %v1128, %v1125
        %v1447 = vpack.c.b16 %v1129, %v1126
        %v1448 = vpack.c.b16 %v1130, %v1127
        %v1449 = vpack.c.b16 %v1134, %v1131
        %v1450 = vpack.c.b16 %v1135, %v1132
        %v1451 = vpack.c.b16 %v1136, %v1133
        %v1452 = vpack.c.b16 %v1140, %v1137
        %v1453 = vpack.c.b16 %v1141, %v1138
        %v1454 = vpack.c.b16 %v1142, %v1139
        %v1455 = vpack.c.b16 %v1146, %v1143
        %v1456 = vpack.c.b16 %v1147, %v1144
        %v1457 = vpack.c.b16 %v1148, %v1145
        %v1458 = vpack.c.b16 %v1152, %v1149
        %v1459 = vpack.c.b16 %v1153, %v1150
        %v1460 = vpack.c.b16 %v1154, %v1151
        %v1461 = vpack.c.b16 %v1158, %v1155
        %v1462 = vpack.c.b16 %v1159, %v1156
        %v1463 = vpack.c.b16 %v1160, %v1157
        %v1464 = vpack.c.b16 %v1164, %v1161
        %v1465 = vpack.c.b16 %v1165, %v1162
        %v1466 = vpack.c.b16 %v1166, %v1163
        %v1467 = vpack.c.b16 %v1170, %v1167
        %v1468 = vpack.c.b16 %v1171, %v1168
        %v1469 = vpack.c.b16 %v1172, %v1169
        %v1470 = vpack.c.b16 %v1176, %v1173
        %v1471 = vpack.c.b16 %v1177, %v1174
        %v1472 = vpack.c.b16 %v1178, %v1175
        %v1473 = vpack.c.b16 %v1182, %v1179
        %v1474 = vpack.c.b16 %v1183, %v1180
        %v1475 = vpack.c.b16 %v1184, %v1181
        %v1476 = vpack.c.b16 %v1188, %v1185
        %v1477 = vpack.c.b16 %v1189, %v1186
        %v1478 = vpack.c.b16 %v1190, %v1187
        %v1479 = vpack.c.b16 %v1194, %v1191
        %v1480 = vpack.c.b16 %v1195, %v1192
        %v1481 = vpack.c.b16 %v1196, %v1193
        %v1482 = vpack.c.b16 %v1200, %v1197
        %v1483 = vpack.c.b16 %v1201, %v1198
        %v1484 = vpack.c.b16 %v1202, %v1199
        %v1485 = vpack.c.b16 %v1206, %v1203
        %v1486 = vpack.c.b16 %v1207, %v1204
        %v1487 = vpack.c.b16 %v1208, %v1205
        %v1488 = vpack.c.b16 %v1212, %v1209
        %v1489 = vpack.c.b16 %v1213, %v1210
        %v1490 = vpack.c.b16 %v1214, %v1211
        %v1491 = vpack.c.b16 %v1218, %v1215
        %v1492 = vpack.c.b16 %v1219, %v1216
        %v1493 = vpack.c.b16 %v1220, %v1217
        %v1494 = vpack.c.b16 %v1224, %v1221
        %v1495 = vpack.c.b16 %v1225, %v1222
        %v1496 = vpack.c.b16 %v1226, %v1223
        %v1497 = vpack.c.b16 %v1230, %v1227
        %v1498 = vpack.c.b16 %v1231, %v1228
        %v1499 = vpack.c.b16 %v1232, %v1229
        %v1500 = vpack.c.b16 %v1236, %v1233
        %v1501 = vpack.c.b16 %v1237, %v1234
        %v1502 = vpack.c.b16 %v1238, %v1235
        %v1503 = vpack.c.b16 %v1242, %v1239
        %v1504 = vpack.c.b16 %v1243, %v1240
        %v1505 = vpack.c.b16 %v1244, %v1241
        %v1506 = vpack.c.b16 %v1248, %v1245
        %v1507 = vpack.c.b16 %v1249, %v1246
        %v1508 = vpack.c.b16 %v1250, %v1247
        %v1509 = vpack.c.b16 %v1254, %v1251
        %v1510 = vpack.c.b16 %v1255, %v1252
        %v1511 = vpack.c.b16 %v1256, %v1253
        %v1512 = vpack.c.b16 %v1260, %v1257
        %v1513 = vpack.c.b16 %v1261, %v1258
        %v1514 = vpack.c.b16 %v1262, %v1259
        %v1515 = vpack.c.b16 %v1266, %v1263
        %v1516 = vpack.c.b16 %v1267, %v1264
        %v1517 = vpack.c.b16 %v1268, %v1265
        %v1518 = vpack.c.b16 %v1272, %v1269
        %v1519 = vpack.c.b16 %v1273, %v1270
        %v1520 = vpack.c.b16 %v1274, %v1271
        %v1521 = vpack.c.b16 %v1278, %v1275
        %v1522 = vpack.c.b16 %v1279, %v1276
        %v1523 = vpack.c.b16 %v1280, %v1277
        %v1524 = vpack.c.b16 %v1284, %v1281
        %v1525 = vpack.c.b16 %v1285, %v1282
        %v1526 = vpack.c.b16 %v1286, %v1283
        %v1527 = vpack.c.b16 %v1290, %v1287
        %v1528 = vpack.c.b16 %v1291, %v1288
        %v1529 = vpack.c.b16 %v1292, %v1289
        %v1530 = vpack.c.b16 %v1296, %v1293
        %v1531 = vpack.c.b16 %v1297, %v1294
        %v1532 = vpack.c.b16 %v1298, %v1295
        %v1533 = vpack.c.b16 %v1302, %v1299
        %v1534 = vpack.c.b16 %v1303, %v1300
        %v1535 = vpack.c.b16 %v1304, %v1301
        %v1536 = vpack.c.b16 %v1308, %v1305
        %v1537 = vpack.c.b16 %v1309, %v1306
        %v1538 = vpack.c.b16 %v1310, %v1307
        %v1539 = vpack.c.b16 %v1314, %v1311
        %v1540 = vpack.c.b16 %v1315, %v1312
        %v1541 = vpack.c.b16 %v1316, %v1313
        %v1542 = vpack.c.b16 %v1320, %v1317
        %v1543 = vpack.c.b16 %v1321, %v1318
        %v1544 = vpack.c.b16 %v1322, %v1319
        %v1545 = vpack.c.b16 %v1326, %v1323
        %v1546 = vpack.c.b16 %v1327, %v1324
        %v1547 = vpack.c.b16 %v1328, %v1325
        %v1548 = vpack.c.b16 %v1332, %v1329
        %v1549 = vpack.c.b16 %v1333, %v1330
        %v1550 = vpack.c.b16 %v1334, %v1331
        %v1551 = vpack.c.b16 %v1338, %v1335
        %v1552 = vpack.c.b16 %v1339, %v1336
        %v1553 = vpack.c.b16 %v1340, %v1337
        %v1554 = vpack.c.b16 %v1344, %v1341
        %v1555 = vpack.c.b16 %v1345, %v1342
        %v1556 = vpack.c.b16 %v1346, %v1343
        %v1557 = vpack.c.b16 %v1350, %v1347
        %v1558 = vpack.c.b16 %v1351, %v1348
        %v1559 = vpack.c.b16 %v1352, %v1349
        %v1560 = vpack.c.b16 %v1356, %v1353
        %v1561 = vpack.c.b16 %v1357, %v1354
        %v1562 = vpack.c.b16 %v1358, %v1355
        %v1563 = vpack.c.b16 %v1362, %v1359
        %v1564 = vpack.c.b16 %v1363, %v1360
        %v1565 = vpack.c.b16 %v1364, %v1361
        %v1566 = vpack.c.b16 %v1368, %v1365
        %v1567 = vpack.c.b16 %v1369, %v1366
        %v1568 = vpack.c.b16 %v1370, %v1367
        %v1569 = vpack.c.b16 %v1374, %v1371
        %v1570 = vpack.c.b16 %v1375, %v1372
        %v1571 = vpack.c.b16 %v1376, %v1373
        %v1572 = vpack.c.b16 %v1380, %v1377
        %v1573 = vpack.c.b16 %v1381, %v1378
        %v1574 = vpack.c.b16 %v1382, %v1379
        %1767 = vmatprep.subr.bf16.mxu0 %v1384
        %1768 = vmatpush1.bf16.msra.mxu0 %v1383
        %1769 = vmatprep.subr.bf16.mxu0 %v1387
        %1770 = vmatpush1.bf16.msra.mxu0 %v1386
        %1771 = vmatprep.subr.bf16.mxu0 %v1390
        %1772 = vmatpush1.bf16.msra.mxu0 %v1389
        %1773 = vmatprep.subr.bf16.mxu0 %v1393
        %1774 = vmatpush1.bf16.msra.mxu0 %v1392
        %1775 = vmatprep.subr.bf16.mxu0 %v1396
        %1776 = vmatpush1.bf16.msra.mxu0 %v1395
        %1777 = vmatprep.subr.bf16.mxu0 %v1399
        %1778 = vmatpush1.bf16.msra.mxu0 %v1398
        %1779 = vmatprep.subr.bf16.mxu0 %v1402
        %1780 = vmatpush1.bf16.msra.mxu0 %v1401
        %1781 = vmatprep.subr.bf16.mxu0 %v1405
        %1782 = vmatpush1.bf16.msra.mxu0 %v1404
        %1783 = vmatprep.subr.bf16.mxu0 %v1408
        %1784 = vmatpush1.bf16.msra.mxu0 %v1407
        %1785 = vmatprep.subr.bf16.mxu0 %v1411
        %1786 = vmatpush1.bf16.msra.mxu0 %v1410
        %1787 = vmatprep.subr.bf16.mxu0 %v1414
        %1788 = vmatpush1.bf16.msra.mxu0 %v1413
        %1789 = vmatprep.subr.bf16.mxu0 %v1417
        %1790 = vmatpush1.bf16.msra.mxu0 %v1416
        %1791 = vmatprep.subr.bf16.mxu0 %v1420
        %1792 = vmatpush1.bf16.msra.mxu0 %v1419
        %1793 = vmatprep.subr.bf16.mxu0 %v1423
        %1794 = vmatpush1.bf16.msra.mxu0 %v1422
        %1795 = vmatprep.subr.bf16.mxu0 %v1426
        %1796 = vmatpush1.bf16.msra.mxu0 %v1425
        %1797 = vmatprep.subr.bf16.mxu0 %v1429
        %1798 = vmatpush1.bf16.msra.mxu0 %v1428
        %1799 = vmatprep.mubr.bf16.mxu0 %v728
        %1800 = vmatmul.mubr.bf16.gmra.mrb[0].mxu0 %v727
        %v1801 = vpop.f32.mrb[0].mxu0
        %v1802 = vadd.f32 0.0, %v1801
        %v1803 = vpop.f32.mrb[0].mxu0
        %v1804 = vadd.f32 0.0, %v1803
        %v1805 = vpop.f32.mrb[0].mxu0
        %v1806 = vpop.f32.mrb[0].mxu0
        %1807 = vdwg.mxu0
        %1808 = vmatprep.subr.bf16.mxu0 %v1432
        %1809 = vmatpush1.bf16.msra.mxu0 %v1431
        %1810 = vmatprep.subr.bf16.mxu0 %v1435
        %1811 = vmatpush1.bf16.msra.mxu0 %v1434
        %1812 = vmatprep.subr.bf16.mxu0 %v1438
        %1813 = vmatpush1.bf16.msra.mxu0 %v1437
        %1814 = vmatprep.subr.bf16.mxu0 %v1441
        %1815 = vmatpush1.bf16.msra.mxu0 %v1440
        %1816 = vmatprep.subr.bf16.mxu0 %v1444
        %1817 = vmatpush1.bf16.msra.mxu0 %v1443
        %1818 = vmatprep.subr.bf16.mxu0 %v1447
        %1819 = vmatpush1.bf16.msra.mxu0 %v1446
        %1820 = vmatprep.subr.bf16.mxu0 %v1450
        %1821 = vmatpush1.bf16.msra.mxu0 %v1449
        %1822 = vmatprep.subr.bf16.mxu0 %v1453
        %1823 = vmatpush1.bf16.msra.mxu0 %v1452
        %1824 = vmatprep.subr.bf16.mxu0 %v1456
        %1825 = vmatpush1.bf16.msra.mxu0 %v1455
        %1826 = vmatprep.subr.bf16.mxu0 %v1459
        %1827 = vmatpush1.bf16.msra.mxu0 %v1458
        %1828 = vmatprep.subr.bf16.mxu0 %v1462
        %1829 = vmatpush1.bf16.msra.mxu0 %v1461
        %1830 = vmatprep.subr.bf16.mxu0 %v1465
        %1831 = vmatpush1.bf16.msra.mxu0 %v1464
        %1832 = vmatprep.subr.bf16.mxu0 %v1468
        %1833 = vmatpush1.bf16.msra.mxu0 %v1467
        %1834 = vmatprep.subr.bf16.mxu0 %v1471
        %1835 = vmatpush1.bf16.msra.mxu0 %v1470
        %1836 = vmatprep.subr.bf16.mxu0 %v1474
        %1837 = vmatpush1.bf16.msra.mxu0 %v1473
        %1838 = vmatprep.subr.bf16.mxu0 %v1477
        %1839 = vmatpush1.bf16.msra.mxu0 %v1476
        %1840 = vmatprep.mubr.bf16.mxu0 %v730
        %1841 = vmatmul.mubr.bf16.gmra.mrb[0].mxu0 %v729
        %v1842 = vpop.f32.mrb[0].mxu0
        %v1843 = vadd.f32 %v1802, %v1842
        %v1844 = vpop.f32.mrb[0].mxu0
        %v1845 = vadd.f32 %v1804, %v1844
        %v1846 = vpop.f32.mrb[0].mxu0
        %v1847 = vpop.f32.mrb[0].mxu0
        %1848 = vdwg.mxu0
        %1849 = vmatprep.subr.bf16.mxu0 %v1480
        %1850 = vmatpush1.bf16.msra.mxu0 %v1479
        %1851 = vmatprep.subr.bf16.mxu0 %v1483
        %1852 = vmatpush1.bf16.msra.mxu0 %v1482
        %1853 = vmatprep.subr.bf16.mxu0 %v1486
        %1854 = vmatpush1.bf16.msra.mxu0 %v1485
        %1855 = vmatprep.subr.bf16.mxu0 %v1489
        %1856 = vmatpush1.bf16.msra.mxu0 %v1488
        %1857 = vmatprep.subr.bf16.mxu0 %v1492
        %1858 = vmatpush1.bf16.msra.mxu0 %v1491
        %1859 = vmatprep.subr.bf16.mxu0 %v1495
        %1860 = vmatpush1.bf16.msra.mxu0 %v1494
        %1861 = vmatprep.subr.bf16.mxu0 %v1498
        %1862 = vmatpush1.bf16.msra.mxu0 %v1497
        %1863 = vmatprep.subr.bf16.mxu0 %v1501
        %1864 = vmatpush1.bf16.msra.mxu0 %v1500
        %1865 = vmatprep.subr.bf16.mxu0 %v1504
        %1866 = vmatpush1.bf16.msra.mxu0 %v1503
        %1867 = vmatprep.subr.bf16.mxu0 %v1507
        %1868 = vmatpush1.bf16.msra.mxu0 %v1506
        %1869 = vmatprep.subr.bf16.mxu0 %v1510
        %1870 = vmatpush1.bf16.msra.mxu0 %v1509
        %1871 = vmatprep.subr.bf16.mxu0 %v1513
        %1872 = vmatpush1.bf16.msra.mxu0 %v1512
        %1873 = vmatprep.subr.bf16.mxu0 %v1516
        %1874 = vmatpush1.bf16.msra.mxu0 %v1515
        %1875 = vmatprep.subr.bf16.mxu0 %v1519
        %1876 = vmatpush1.bf16.msra.mxu0 %v1518
        %1877 = vmatprep.subr.bf16.mxu0 %v1522
        %1878 = vmatpush1.bf16.msra.mxu0 %v1521
        %1879 = vmatprep.subr.bf16.mxu0 %v1525
        %1880 = vmatpush1.bf16.msra.mxu0 %v1524
        %1881 = vmatprep.mubr.bf16.mxu0 %v732
        %1882 = vmatmul.mubr.bf16.gmra.mrb[0].mxu0 %v731
        %v1883 = vpop.f32.mrb[0].mxu0
        %v1884 = vadd.f32 %v1843, %v1883
        %v1885 = vpop.f32.mrb[0].mxu0
        %v1886 = vadd.f32 %v1845, %v1885
        %v1887 = vpop.f32.mrb[0].mxu0
        %v1888 = vpop.f32.mrb[0].mxu0
        %1889 = vdwg.mxu0
        %1890 = vmatprep.subr.bf16.mxu0 %v1528
        %1891 = vmatpush1.bf16.msra.mxu0 %v1527
        %1892 = vmatprep.subr.bf16.mxu0 %v1531
        %1893 = vmatpush1.bf16.msra.mxu0 %v1530
        %1894 = vmatprep.subr.bf16.mxu0 %v1534
        %1895 = vmatpush1.bf16.msra.mxu0 %v1533
        %1896 = vmatprep.subr.bf16.mxu0 %v1537
        %1897 = vmatpush1.bf16.msra.mxu0 %v1536
        %1898 = vmatprep.subr.bf16.mxu0 %v1540
        %1899 = vmatpush1.bf16.msra.mxu0 %v1539
        %1900 = vmatprep.subr.bf16.mxu0 %v1543
        %1901 = vmatpush1.bf16.msra.mxu0 %v1542
        %1902 = vmatprep.subr.bf16.mxu0 %v1546
        %1903 = vmatpush1.bf16.msra.mxu0 %v1545
        %1904 = vmatprep.subr.bf16.mxu0 %v1549
        %1905 = vmatpush1.bf16.msra.mxu0 %v1548
        %1906 = vmatprep.subr.bf16.mxu0 %v1552
        %1907 = vmatpush1.bf16.msra.mxu0 %v1551
        %1908 = vmatprep.subr.bf16.mxu0 %v1555
        %1909 = vmatpush1.bf16.msra.mxu0 %v1554
        %1910 = vmatprep.subr.bf16.mxu0 %v1558
        %1911 = vmatpush1.bf16.msra.mxu0 %v1557
        %1912 = vmatprep.subr.bf16.mxu0 %v1561
        %1913 = vmatpush1.bf16.msra.mxu0 %v1560
        %1914 = vmatprep.subr.bf16.mxu0 %v1564
        %1915 = vmatpush1.bf16.msra.mxu0 %v1563
        %1916 = vmatprep.subr.bf16.mxu0 %v1567
        %1917 = vmatpush1.bf16.msra.mxu0 %v1566
        %1918 = vmatprep.subr.bf16.mxu0 %v1570
        %1919 = vmatpush1.bf16.msra.mxu0 %v1569
        %1920 = vmatprep.subr.bf16.mxu0 %v1573
        %1921 = vmatpush1.bf16.msra.mxu0 %v1572
        %1922 = vmatprep.mubr.bf16.mxu0 %v734
        %1923 = vmatmul.mubr.bf16.gmra.mrb[0].mxu0 %v733
        %v1924 = vpop.f32.mrb[0].mxu0
        %v1925 = vadd.f32 %v1884, %v1924
        %v1926 = vpop.f32.mrb[0].mxu0
        %v1927 = vadd.f32 %v1886, %v1926
        %v1928 = vpop.f32.mrb[0].mxu0
        %v1929 = vpop.f32.mrb[0].mxu0
        %1930 = vdwg.mxu0
        %1931 = vmatprep.subr.bf16.mxu0 0
        %1932 = vmatpush1.bf16.msra.mxu0 %v1385
        %1933 = vmatprep.subr.bf16.mxu0 0
        %1934 = vmatpush1.bf16.msra.mxu0 %v1388
        %1935 = vmatprep.subr.bf16.mxu0 0
        %1936 = vmatpush1.bf16.msra.mxu0 %v1391
        %1937 = vmatprep.subr.bf16.mxu0 0
        %1938 = vmatpush1.bf16.msra.mxu0 %v1394
        %1939 = vmatprep.subr.bf16.mxu0 0
        %1940 = vmatpush1.bf16.msra.mxu0 %v1397
        %1941 = vmatprep.subr.bf16.mxu0 0
        %1942 = vmatpush1.bf16.msra.mxu0 %v1400
        %1943 = vmatprep.subr.bf16.mxu0 0
        %1944 = vmatpush1.bf16.msra.mxu0 %v1403
        %1945 = vmatprep.subr.bf16.mxu0 0
        %1946 = vmatpush1.bf16.msra.mxu0 %v1406
        %1947 = vmatprep.subr.bf16.mxu0 0
        %1948 = vmatpush1.bf16.msra.mxu0 %v1409
        %1949 = vmatprep.subr.bf16.mxu0 0
        %1950 = vmatpush1.bf16.msra.mxu0 %v1412
        %1951 = vmatprep.subr.bf16.mxu0 0
        %1952 = vmatpush1.bf16.msra.mxu0 %v1415
        %1953 = vmatprep.subr.bf16.mxu0 0
        %1954 = vmatpush1.bf16.msra.mxu0 %v1418
        %1955 = vmatprep.subr.bf16.mxu0 0
        %1956 = vmatpush1.bf16.msra.mxu0 %v1421
        %1957 = vmatprep.subr.bf16.mxu0 0
        %1958 = vmatpush1.bf16.msra.mxu0 %v1424
        %1959 = vmatprep.subr.bf16.mxu0 0
        %1960 = vmatpush1.bf16.msra.mxu0 %v1427
        %1961 = vmatprep.subr.bf16.mxu0 0
        %1962 = vmatpush1.bf16.msra.mxu0 %v1430
        %1963 = vmatprep.mubr.bf16.mxu0 %v728
        %1964 = vmatmul.mubr.bf16.gmra.mrb[0].mxu0 %v727
        %v1965 = vpop.f32.mrb[0].mxu0
        %v1966 = vadd.f32 0.0, %v1965
        %v1967 = vpop.f32.mrb[0].mxu0
        %v1968 = vpop.f32.mrb[0].mxu0
        %v1969 = vpop.f32.mrb[0].mxu0
        %1970 = vdwg.mxu0
        %1971 = vmatprep.subr.bf16.mxu0 0
        %1972 = vmatpush1.bf16.msra.mxu0 %v1433
        %1973 = vmatprep.subr.bf16.mxu0 0
        %1974 = vmatpush1.bf16.msra.mxu0 %v1436
        %1975 = vmatprep.subr.bf16.mxu0 0
        %1976 = vmatpush1.bf16.msra.mxu0 %v1439
        %1977 = vmatprep.subr.bf16.mxu0 0
        %1978 = vmatpush1.bf16.msra.mxu0 %v1442
        %1979 = vmatprep.subr.bf16.mxu0 0
        %1980 = vmatpush1.bf16.msra.mxu0 %v1445
        %1981 = vmatprep.subr.bf16.mxu0 0
        %1982 = vmatpush1.bf16.msra.mxu0 %v1448
        %1983 = vmatprep.subr.bf16.mxu0 0
        %1984 = vmatpush1.bf16.msra.mxu0 %v1451
        %1985 = vmatprep.subr.bf16.mxu0 0
        %1986 = vmatpush1.bf16.msra.mxu0 %v1454
        %1987 = vmatprep.subr.bf16.mxu0 0
        %1988 = vmatpush1.bf16.msra.mxu0 %v1457
        %1989 = vmatprep.subr.bf16.mxu0 0
        %1990 = vmatpush1.bf16.msra.mxu0 %v1460
        %1991 = vmatprep.subr.bf16.mxu0 0
        %1992 = vmatpush1.bf16.msra.mxu0 %v1463
        %1993 = vmatprep.subr.bf16.mxu0 0
        %1994 = vmatpush1.bf16.msra.mxu0 %v1466
        %1995 = vmatprep.subr.bf16.mxu0 0
        %1996 = vmatpush1.bf16.msra.mxu0 %v1469
        %1997 = vmatprep.subr.bf16.mxu0 0
        %1998 = vmatpush1.bf16.msra.mxu0 %v1472
        %1999 = vmatprep.subr.bf16.mxu0 0
        %2000 = vmatpush1.bf16.msra.mxu0 %v1475
        %2001 = vmatprep.subr.bf16.mxu0 0
        %2002 = vmatpush1.bf16.msra.mxu0 %v1478
        %2003 = vmatprep.mubr.bf16.mxu0 %v730
        %2004 = vmatmul.mubr.bf16.gmra.mrb[0].mxu0 %v729
        %v2005 = vpop.f32.mrb[0].mxu0
        %v2006 = vadd.f32 %v1966, %v2005
        %v2007 = vpop.f32.mrb[0].mxu0
        %v2008 = vpop.f32.mrb[0].mxu0
        %v2009 = vpop.f32.mrb[0].mxu0
        %2010 = vdwg.mxu0
        %2011 = vmatprep.subr.bf16.mxu0 0
        %2012 = vmatpush1.bf16.msra.mxu0 %v1481
        %2013 = vmatprep.subr.bf16.mxu0 0
        %2014 = vmatpush1.bf16.msra.mxu0 %v1484
        %2015 = vmatprep.subr.bf16.mxu0 0
        %2016 = vmatpush1.bf16.msra.mxu0 %v1487
        %2017 = vmatprep.subr.bf16.mxu0 0
        %2018 = vmatpush1.bf16.msra.mxu0 %v1490
        %2019 = vmatprep.subr.bf16.mxu0 0
        %2020 = vmatpush1.bf16.msra.mxu0 %v1493
        %2021 = vmatprep.subr.bf16.mxu0 0
        %2022 = vmatpush1.bf16.msra.mxu0 %v1496
        %2023 = vmatprep.subr.bf16.mxu0 0
        %2024 = vmatpush1.bf16.msra.mxu0 %v1499
        %2025 = vmatprep.subr.bf16.mxu0 0
        %2026 = vmatpush1.bf16.msra.mxu0 %v1502
        %2027 = vmatprep.subr.bf16.mxu0 0
        %2028 = vmatpush1.bf16.msra.mxu0 %v1505
        %2029 = vmatprep.subr.bf16.mxu0 0
        %2030 = vmatpush1.bf16.msra.mxu0 %v1508
        %2031 = vmatprep.subr.bf16.mxu0 0
        %2032 = vmatpush1.bf16.msra.mxu0 %v1511
        %2033 = vmatprep.subr.bf16.mxu0 0
        %2034 = vmatpush1.bf16.msra.mxu0 %v1514
        %2035 = vmatprep.subr.bf16.mxu0 0
        %2036 = vmatpush1.bf16.msra.mxu0 %v1517
        %2037 = vmatprep.subr.bf16.mxu0 0
        %2038 = vmatpush1.bf16.msra.mxu0 %v1520
        %2039 = vmatprep.subr.bf16.mxu0 0
        %2040 = vmatpush1.bf16.msra.mxu0 %v1523
        %2041 = vmatprep.subr.bf16.mxu0 0
        %2042 = vmatpush1.bf16.msra.mxu0 %v1526
        %2043 = vmatprep.mubr.bf16.mxu0 %v732
        %2044 = vmatmul.mubr.bf16.gmra.mrb[0].mxu0 %v731
        %v2045 = vpop.f32.mrb[0].mxu0
        %v2046 = vadd.f32 %v2006, %v2045
        %v2047 = vpop.f32.mrb[0].mxu0
        %v2048 = vpop.f32.mrb[0].mxu0
        %v2049 = vpop.f32.mrb[0].mxu0
        %2050 = vdwg.mxu0
        %2051 = vmatprep.subr.bf16.mxu0 0
        %2052 = vmatpush1.bf16.msra.mxu0 %v1529
        %2053 = vmatprep.subr.bf16.mxu0 0
        %2054 = vmatpush1.bf16.msra.mxu0 %v1532
        %2055 = vmatprep.subr.bf16.mxu0 0
        %2056 = vmatpush1.bf16.msra.mxu0 %v1535
        %2057 = vmatprep.subr.bf16.mxu0 0
        %2058 = vmatpush1.bf16.msra.mxu0 %v1538
        %2059 = vmatprep.subr.bf16.mxu0 0
        %2060 = vmatpush1.bf16.msra.mxu0 %v1541
        %2061 = vmatprep.subr.bf16.mxu0 0
        %2062 = vmatpush1.bf16.msra.mxu0 %v1544
        %2063 = vmatprep.subr.bf16.mxu0 0
        %2064 = vmatpush1.bf16.msra.mxu0 %v1547
        %2065 = vmatprep.subr.bf16.mxu0 0
        %2066 = vmatpush1.bf16.msra.mxu0 %v1550
        %2067 = vmatprep.subr.bf16.mxu0 0
        %2068 = vmatpush1.bf16.msra.mxu0 %v1553
        %2069 = vmatprep.subr.bf16.mxu0 0
        %2070 = vmatpush1.bf16.msra.mxu0 %v1556
        %2071 = vmatprep.subr.bf16.mxu0 0
        %2072 = vmatpush1.bf16.msra.mxu0 %v1559
        %2073 = vmatprep.subr.bf16.mxu0 0
        %2074 = vmatpush1.bf16.msra.mxu0 %v1562
        %2075 = vmatprep.subr.bf16.mxu0 0
        %2076 = vmatpush1.bf16.msra.mxu0 %v1565
        %2077 = vmatprep.subr.bf16.mxu0 0
        %2078 = vmatpush1.bf16.msra.mxu0 %v1568
        %2079 = vmatprep.subr.bf16.mxu0 0
        %2080 = vmatpush1.bf16.msra.mxu0 %v1571
        %2081 = vmatprep.subr.bf16.mxu0 0
        %2082 = vmatpush1.bf16.msra.mxu0 %v1574
        %2083 = vmatprep.mubr.bf16.mxu0 %v734
        %2084 = vmatmul.mubr.bf16.gmra.mrb[0].mxu0 %v733
        %v2085 = vpop.f32.mrb[0].mxu0
        %v2086 = vadd.f32 %v2046, %v2085
        %v2087 = vpop.f32.mrb[0].mxu0
        %v2088 = vpop.f32.mrb[0].mxu0
        %v2089 = vpop.f32.mrb[0].mxu0
        %2090 = vdwg.mxu0
        %v2091 = vpack.c.bf16 %v458, %v458
        %v2092 = vld [vmem:[%s3] sm:$0xff]
        %v2093 = vld [vmem:[%s3 + $0x8] sm:$0xf]
        %v2094 = vld [vmem:[%s3 + $0xc] sm:$0xff]
        %v2095 = vld [vmem:[%s3 + $0x14] sm:$0xf]
        %v2096 = vld [vmem:[%s3 + $0x18] sm:$0xff]
        %v2097 = vld [vmem:[%s3 + $0x20] sm:$0xf]
        %v2098 = vld [vmem:[%s3 + $0x24] sm:$0xff]
        %v2099 = vld [vmem:[%s3 + $0x2c] sm:$0xf]
        %v2100 = vld [vmem:[%s3 + $0x30] sm:$0xff]
        %v2101 = vld [vmem:[%s3 + $0x38] sm:$0xf]
        %v2102 = vld [vmem:[%s3 + $0x3c] sm:$0xff]
        %v2103 = vld [vmem:[%s3 + $0x44] sm:$0xf]
        %v2104 = vld [vmem:[%s3 + $0x48] sm:$0xff]
        %v2105 = vld [vmem:[%s3 + $0x50] sm:$0xf]
        %v2106 = vld [vmem:[%s3 + $0x54] sm:$0xff]
        %v2107 = vld [vmem:[%s3 + $0x5c] sm:$0xf]
        %v2108 = vld [vmem:[%s3 + $0x60] sm:$0xff]
        %v2109 = vld [vmem:[%s3 + $0x68] sm:$0xf]
        %v2110 = vld [vmem:[%s3 + $0x6c] sm:$0xff]
        %v2111 = vld [vmem:[%s3 + $0x74] sm:$0xf]
        %v2112 = vld [vmem:[%s3 + $0x78] sm:$0xff]
        %v2113 = vld [vmem:[%s3 + $0x80] sm:$0xf]
        %v2114 = vld [vmem:[%s3 + $0x84] sm:$0xff]
        %v2115 = vld [vmem:[%s3 + $0x8c] sm:$0xf]
        %v2116 = vld [vmem:[%s3 + $0x90] sm:$0xff]
        %v2117 = vld [vmem:[%s3 + $0x98] sm:$0xf]
        %v2118 = vld [vmem:[%s3 + $0x9c] sm:$0xff]
        %v2119 = vld [vmem:[%s3 + $0xa4] sm:$0xf]
        %v2120 = vld [vmem:[%s3 + $0xa8] sm:$0xff]
        %v2121 = vld [vmem:[%s3 + $0xb0] sm:$0xf]
        %v2122 = vld [vmem:[%s3 + $0xb4] sm:$0xff]
        %v2123 = vld [vmem:[%s3 + $0xbc] sm:$0xf]
        %v2156 = vunpack.c.l.b16 %v2092
        %v2157 = vunpack.c.h.b16 %v2092
        %v2158 = vunpack.c.l.b16 %v2093
        %v2159 = vunpack.c.l.b16 %v2094
        %v2160 = vunpack.c.h.b16 %v2094
        %v2161 = vunpack.c.l.b16 %v2095
        %v2162 = vunpack.c.l.b16 %v2096
        %v2163 = vunpack.c.h.b16 %v2096
        %v2164 = vunpack.c.l.b16 %v2097
        %v2165 = vunpack.c.l.b16 %v2098
        %v2166 = vunpack.c.h.b16 %v2098
        %v2167 = vunpack.c.l.b16 %v2099
        %v2168 = vunpack.c.l.b16 %v2100
        %v2169 = vunpack.c.h.b16 %v2100
        %v2170 = vunpack.c.l.b16 %v2101
        %v2171 = vunpack.c.l.b16 %v2102
        %v2172 = vunpack.c.h.b16 %v2102
        %v2173 = vunpack.c.l.b16 %v2103
        %v2174 = vunpack.c.l.b16 %v2104
        %v2175 = vunpack.c.h.b16 %v2104
        %v2176 = vunpack.c.l.b16 %v2105
        %v2177 = vunpack.c.l.b16 %v2106
        %v2178 = vunpack.c.h.b16 %v2106
        %v2179 = vunpack.c.l.b16 %v2107
        %v2180 = vunpack.c.l.b16 %v2108
        %v2181 = vunpack.c.h.b16 %v2108
        %v2182 = vunpack.c.l.b16 %v2109
        %v2183 = vunpack.c.l.b16 %v2110
        %v2184 = vunpack.c.h.b16 %v2110
        %v2185 = vunpack.c.l.b16 %v2111
        %v2186 = vunpack.c.l.b16 %v2112
        %v2187 = vunpack.c.h.b16 %v2112
        %v2188 = vunpack.c.l.b16 %v2113
        %v2189 = vunpack.c.l.b16 %v2114
        %v2190 = vunpack.c.h.b16 %v2114
        %v2191 = vunpack.c.l.b16 %v2115
        %v2192 = vunpack.c.l.b16 %v2116
        %v2193 = vunpack.c.h.b16 %v2116
        %v2194 = vunpack.c.l.b16 %v2117
        %v2195 = vunpack.c.l.b16 %v2118
        %v2196 = vunpack.c.h.b16 %v2118
        %v2197 = vunpack.c.l.b16 %v2119
        %v2198 = vunpack.c.l.b16 %v2120
        %v2199 = vunpack.c.h.b16 %v2120
        %v2200 = vunpack.c.l.b16 %v2121
        %v2201 = vunpack.c.l.b16 %v2122
        %v2202 = vunpack.c.h.b16 %v2122
        %v2203 = vunpack.c.l.b16 %v2123
        %v2204 = vpack.c.b16 %v2159, %v2156
        %v2205 = vpack.c.b16 %v2160, %v2157
        %v2206 = vpack.c.b16 %v2161, %v2158
        %v2207 = vpack.c.b16 %v2165, %v2162
        %v2208 = vpack.c.b16 %v2166, %v2163
        %v2209 = vpack.c.b16 %v2167, %v2164
        %v2210 = vpack.c.b16 %v2171, %v2168
        %v2211 = vpack.c.b16 %v2172, %v2169
        %v2212 = vpack.c.b16 %v2173, %v2170
        %v2213 = vpack.c.b16 %v2177, %v2174
        %v2214 = vpack.c.b16 %v2178, %v2175
        %v2215 = vpack.c.b16 %v2179, %v2176
        %v2216 = vpack.c.b16 %v2183, %v2180
        %v2217 = vpack.c.b16 %v2184, %v2181
        %v2218 = vpack.c.b16 %v2185, %v2182
        %v2219 = vpack.c.b16 %v2189, %v2186
        %v2220 = vpack.c.b16 %v2190, %v2187
        %v2221 = vpack.c.b16 %v2191, %v2188
        %v2222 = vpack.c.b16 %v2195, %v2192
        %v2223 = vpack.c.b16 %v2196, %v2193
        %v2224 = vpack.c.b16 %v2197, %v2194
        %v2225 = vpack.c.b16 %v2201, %v2198
        %v2226 = vpack.c.b16 %v2202, %v2199
        %v2227 = vpack.c.b16 %v2203, %v2200
        %2252 = vmatprep.subr.bf16.mxu0 %v2205
        %2253 = vmatpush1.bf16.msra.mxu0 %v2204
        %2254 = vmatprep.subr.bf16.mxu0 %v2208
        %2255 = vmatpush1.bf16.msra.mxu0 %v2207
        %2256 = vmatprep.subr.bf16.mxu0 %v2211
        %2257 = vmatpush1.bf16.msra.mxu0 %v2210
        %2258 = vmatprep.subr.bf16.mxu0 %v2214
        %2259 = vmatpush1.bf16.msra.mxu0 %v2213
        %2260 = vmatprep.subr.bf16.mxu0 %v2217
        %2261 = vmatpush1.bf16.msra.mxu0 %v2216
        %2262 = vmatprep.subr.bf16.mxu0 %v2220
        %2263 = vmatpush1.bf16.msra.mxu0 %v2219
        %2264 = vmatprep.subr.bf16.mxu0 %v2223
        %2265 = vmatpush1.bf16.msra.mxu0 %v2222
        %2266 = vmatprep.subr.bf16.mxu0 %v2226
        %2267 = vmatpush1.bf16.msra.mxu0 %v2225
        %2268 = vmatprep.subr.bf16.mxu0 0
        %2269 = vmatpush1.bf16.msra.mxu0 0
        %2270 = vmatprep.subr.bf16.mxu0 0
        %2271 = vmatpush1.bf16.msra.mxu0 0
        %2272 = vmatprep.subr.bf16.mxu0 0
        %2273 = vmatpush1.bf16.msra.mxu0 0
        %2274 = vmatprep.subr.bf16.mxu0 0
        %2275 = vmatpush1.bf16.msra.mxu0 0
        %2276 = vmatprep.subr.bf16.mxu0 0
        %2277 = vmatpush1.bf16.msra.mxu0 0
        %2278 = vmatprep.subr.bf16.mxu0 0
        %2279 = vmatpush1.bf16.msra.mxu0 0
        %2280 = vmatprep.subr.bf16.mxu0 0
        %2281 = vmatpush1.bf16.msra.mxu0 0
        %2282 = vmatprep.subr.bf16.mxu0 0
        %2283 = vmatpush1.bf16.msra.mxu0 0
        %2284 = vmatprep.mubr.bf16.mxu0 0
        %2285 = vmatmul.mubr.bf16.gmra.mrb[0].mxu0 %v2091
        %v2286 = vpop.f32.mrb[0].mxu0
        %v2287 = vadd.f32 0.0, %v2286
        %v2288 = vpop.f32.mrb[0].mxu0
        %v2289 = vadd.f32 0.0, %v2288
        %v2290 = vpop.f32.mrb[0].mxu0
        %v2291 = vpop.f32.mrb[0].mxu0
        %2292 = vdwg.mxu0
        %2293 = vmatprep.subr.bf16.mxu0 0
        %2294 = vmatpush1.bf16.msra.mxu0 %v2206
        %2295 = vmatprep.subr.bf16.mxu0 0
        %2296 = vmatpush1.bf16.msra.mxu0 %v2209
        %2297 = vmatprep.subr.bf16.mxu0 0
        %2298 = vmatpush1.bf16.msra.mxu0 %v2212
        %2299 = vmatprep.subr.bf16.mxu0 0
        %2300 = vmatpush1.bf16.msra.mxu0 %v2215
        %2301 = vmatprep.subr.bf16.mxu0 0
        %2302 = vmatpush1.bf16.msra.mxu0 %v2218
        %2303 = vmatprep.subr.bf16.mxu0 0
        %2304 = vmatpush1.bf16.msra.mxu0 %v2221
        %2305 = vmatprep.subr.bf16.mxu0 0
        %2306 = vmatpush1.bf16.msra.mxu0 %v2224
        %2307 = vmatprep.subr.bf16.mxu0 0
        %2308 = vmatpush1.bf16.msra.mxu0 %v2227
        %2309 = vmatprep.subr.bf16.mxu0 0
        %2310 = vmatpush1.bf16.msra.mxu0 0
        %2311 = vmatprep.subr.bf16.mxu0 0
        %2312 = vmatpush1.bf16.msra.mxu0 0
        %2313 = vmatprep.subr.bf16.mxu0 0
        %2314 = vmatpush1.bf16.msra.mxu0 0
        %2315 = vmatprep.subr.bf16.mxu0 0
        %2316 = vmatpush1.bf16.msra.mxu0 0
        %2317 = vmatprep.subr.bf16.mxu0 0
        %2318 = vmatpush1.bf16.msra.mxu0 0
        %2319 = vmatprep.subr.bf16.mxu0 0
        %2320 = vmatpush1.bf16.msra.mxu0 0
        %2321 = vmatprep.subr.bf16.mxu0 0
        %2322 = vmatpush1.bf16.msra.mxu0 0
        %2323 = vmatprep.subr.bf16.mxu0 0
        %2324 = vmatpush1.bf16.msra.mxu0 0
        %2325 = vmatprep.mubr.bf16.mxu0 0
        %2326 = vmatmul.mubr.bf16.gmra.mrb[0].mxu0 %v2091
        %v2327 = vpop.f32.mrb[0].mxu0
        %v2328 = vadd.f32 0.0, %v2327
        %v2329 = vpop.f32.mrb[0].mxu0
        %v2330 = vpop.f32.mrb[0].mxu0
        %v2331 = vpop.f32.mrb[0].mxu0
        %2332 = vdwg.mxu0
        %v2333 = vld [vmem:[%s6] ss:$2 sm:$0x3]
        %v2334 = vld [vmem:[%s6 + $0x4] sm:$0x1]
        %v2335 = vld [vmem:[%s6 + $0x6] sm:$0x1]
        %v2336 = vadd.f32 %v1925, %v2287
        %v2337 = vadd.f32 %v1927, %v2289
        %v2339 = vlaneseq
        %v2340 = vshrl.u32 %v2339, 7
        %v2341 = vsub.s32 0, %v2340
        %v2342 = vrot.slane %v2333, %v2341
        %v2343 = vlaneseq
        %v2344 = vshrl.u32 %v2343, 7
        %v2345 = vsub.s32 1, %v2344
        %v2346 = vrot.slane %v2333, %v2345
        %v2349 = vadd.f32 %v2336, %v2342
        %v2350 = vadd.f32 %v2337, %v2346
        %v2351 = vxor.u32 %v2349, 2147483648
        %v2352 = vxor.u32 %v2350, 2147483648
        %v2353 = vmul.f32 %v2351, 1.442695
        %v2354 = vpow.pop %v2353
        %v2355 = vmul.f32 %v2352, 1.442695
        %v2356 = vpow.pop %v2355
        %v2357 = vadd.f32 %v2354, 1.0
        %v2358 = vadd.f32 %v2356, 1.0
        %v2359 = vrcp.pop %v2357
        %v2360 = vmul.f32 1.0, %v2359
        %v2361 = vrcp.pop %v2358
        %v2362 = vmul.f32 1.0, %v2361
        %v2363 = vlaneseq
        %v2364 = vshrl.u32 %v2363, 7
        %v2365 = vsub.s32 0, %v2364
        %v2366 = vrot.slane %v2334, %v2365
        %v2367 = vadd.f32 %v2086, %v2366
        %v2368 = vlaneseq
        %v2369 = vshrl.u32 %v2368, 7
        %v2370 = vsub.s32 0, %v2369
        %v2371 = vrot.slane %v2335, %v2370
        %v2372 = vadd.f32 %v2328, %v2371
        %v2373 = vmul.f32 %v2360, %v2372
        %v2374 = vadd.f32 %v2367, %v2373
        %v2375 = vtanh.pop %v2374
        %v2376 = vsub.f32 1.0, %v2362
        %v2377 = vmul.f32 %v2376, %v2375
        %v2378 = vmul.f32 %v2362, %v458
        %v2379 = vadd.f32 %v2377, %v2378
        %2380 = vst [vmem:[%s443] sm:$0xff] %v2379
        %v2381 = vpack.c.bf16 %v2379, %v2379
        %s2382 = scalar_lea.vmem %s386, 8 [#allocation3]
        %v2383 = vld [vmem:[%s2382] sm:$0xff]
        %v2384 = vld [vmem:[#allocation8] sm:$0xff]
        %v2385 = vld [vmem:[#allocation8 + $0x8] sm:$0xf]
        %v2386 = vld [vmem:[#allocation8 + $0xc] sm:$0xff]
        %v2387 = vld [vmem:[#allocation8 + $0x14] sm:$0xf]
        %v2388 = vld [vmem:[#allocation8 + $0x18] sm:$0xff]
        %v2389 = vld [vmem:[#allocation8 + $0x20] sm:$0xf]
        %v2390 = vld [vmem:[#allocation8 + $0x24] sm:$0xff]
        %v2391 = vld [vmem:[#allocation8 + $0x2c] sm:$0xf]
        %v2392 = vld [vmem:[#allocation8 + $0x30] sm:$0xff]
        %v2393 = vld [vmem:[#allocation8 + $0x38] sm:$0xf]
        %v2394 = vld [vmem:[#allocation8 + $0x3c] sm:$0xff]
        %v2395 = vld [vmem:[#allocation8 + $0x44] sm:$0xf]
        %v2396 = vld [vmem:[#allocation8 + $0x48] sm:$0xff]
        %v2397 = vld [vmem:[#allocation8 + $0x50] sm:$0xf]
        %v2398 = vld [vmem:[#allocation8 + $0x54] sm:$0xff]
        %v2399 = vld [vmem:[#allocation8 + $0x5c] sm:$0xf]
        %v2400 = vld [vmem:[#allocation8 + $0x60] sm:$0xff]
        %v2401 = vld [vmem:[#allocation8 + $0x68] sm:$0xf]
        %v2402 = vld [vmem:[#allocation8 + $0x6c] sm:$0xff]
        %v2403 = vld [vmem:[#allocation8 + $0x74] sm:$0xf]
        %v2404 = vld [vmem:[#allocation8 + $0x78] sm:$0xff]
        %v2405 = vld [vmem:[#allocation8 + $0x80] sm:$0xf]
        %v2406 = vld [vmem:[#allocation8 + $0x84] sm:$0xff]
        %v2407 = vld [vmem:[#allocation8 + $0x8c] sm:$0xf]
        %v2408 = vld [vmem:[#allocation8 + $0x90] sm:$0xff]
        %v2409 = vld [vmem:[#allocation8 + $0x98] sm:$0xf]
        %v2410 = vld [vmem:[#allocation8 + $0x9c] sm:$0xff]
        %v2411 = vld [vmem:[#allocation8 + $0xa4] sm:$0xf]
        %v2412 = vld [vmem:[#allocation8 + $0xa8] sm:$0xff]
        %v2413 = vld [vmem:[#allocation8 + $0xb0] sm:$0xf]
        %v2414 = vld [vmem:[#allocation8 + $0xb4] sm:$0xff]
        %v2415 = vld [vmem:[#allocation8 + $0xbc] sm:$0xf]
        %v2448 = vunpack.c.l.b16 %v2384
        %v2449 = vunpack.c.h.b16 %v2384
        %v2450 = vunpack.c.l.b16 %v2385
        %v2451 = vunpack.c.l.b16 %v2386
        %v2452 = vunpack.c.h.b16 %v2386
        %v2453 = vunpack.c.l.b16 %v2387
        %v2454 = vunpack.c.l.b16 %v2388
        %v2455 = vunpack.c.h.b16 %v2388
        %v2456 = vunpack.c.l.b16 %v2389
        %v2457 = vunpack.c.l.b16 %v2390
        %v2458 = vunpack.c.h.b16 %v2390
        %v2459 = vunpack.c.l.b16 %v2391
        %v2460 = vunpack.c.l.b16 %v2392
        %v2461 = vunpack.c.h.b16 %v2392
        %v2462 = vunpack.c.l.b16 %v2393
        %v2463 = vunpack.c.l.b16 %v2394
        %v2464 = vunpack.c.h.b16 %v2394
        %v2465 = vunpack.c.l.b16 %v2395
        %v2466 = vunpack.c.l.b16 %v2396
        %v2467 = vunpack.c.h.b16 %v2396
        %v2468 = vunpack.c.l.b16 %v2397
        %v2469 = vunpack.c.l.b16 %v2398
        %v2470 = vunpack.c.h.b16 %v2398
        %v2471 = vunpack.c.l.b16 %v2399
        %v2472 = vunpack.c.l.b16 %v2400
        %v2473 = vunpack.c.h.b16 %v2400
        %v2474 = vunpack.c.l.b16 %v2401
        %v2475 = vunpack.c.l.b16 %v2402
        %v2476 = vunpack.c.h.b16 %v2402
        %v2477 = vunpack.c.l.b16 %v2403
        %v2478 = vunpack.c.l.b16 %v2404
        %v2479 = vunpack.c.h.b16 %v2404
        %v2480 = vunpack.c.l.b16 %v2405
        %v2481 = vunpack.c.l.b16 %v2406
        %v2482 = vunpack.c.h.b16 %v2406
        %v2483 = vunpack.c.l.b16 %v2407
        %v2484 = vunpack.c.l.b16 %v2408
        %v2485 = vunpack.c.h.b16 %v2408
        %v2486 = vunpack.c.l.b16 %v2409
        %v2487 = vunpack.c.l.b16 %v2410
        %v2488 = vunpack.c.h.b16 %v2410
        %v2489 = vunpack.c.l.b16 %v2411
        %v2490 = vunpack.c.l.b16 %v2412
        %v2491 = vunpack.c.h.b16 %v2412
        %v2492 = vunpack.c.l.b16 %v2413
        %v2493 = vunpack.c.l.b16 %v2414
        %v2494 = vunpack.c.h.b16 %v2414
        %v2495 = vunpack.c.l.b16 %v2415
        %v2496 = vpack.c.b16 %v2451, %v2448
        %v2497 = vpack.c.b16 %v2452, %v2449
        %v2498 = vpack.c.b16 %v2453, %v2450
        %v2499 = vpack.c.b16 %v2457, %v2454
        %v2500 = vpack.c.b16 %v2458, %v2455
        %v2501 = vpack.c.b16 %v2459, %v2456
        %v2502 = vpack.c.b16 %v2463, %v2460
        %v2503 = vpack.c.b16 %v2464, %v2461
        %v2504 = vpack.c.b16 %v2465, %v2462
        %v2505 = vpack.c.b16 %v2469, %v2466
        %v2506 = vpack.c.b16 %v2470, %v2467
        %v2507 = vpack.c.b16 %v2471, %v2468
        %v2508 = vpack.c.b16 %v2475, %v2472
        %v2509 = vpack.c.b16 %v2476, %v2473
        %v2510 = vpack.c.b16 %v2477, %v2474
        %v2511 = vpack.c.b16 %v2481, %v2478
        %v2512 = vpack.c.b16 %v2482, %v2479
        %v2513 = vpack.c.b16 %v2483, %v2480
        %v2514 = vpack.c.b16 %v2487, %v2484
        %v2515 = vpack.c.b16 %v2488, %v2485
        %v2516 = vpack.c.b16 %v2489, %v2486
        %v2517 = vpack.c.b16 %v2493, %v2490
        %v2518 = vpack.c.b16 %v2494, %v2491
        %v2519 = vpack.c.b16 %v2495, %v2492
        %2544 = vmatprep.subr.bf16.mxu0 %v2497
        %2545 = vmatpush1.bf16.msra.mxu0 %v2496
        %2546 = vmatprep.subr.bf16.mxu0 %v2500
        %2547 = vmatpush1.bf16.msra.mxu0 %v2499
        %2548 = vmatprep.subr.bf16.mxu0 %v2503
        %2549 = vmatpush1.bf16.msra.mxu0 %v2502
        %2550 = vmatprep.subr.bf16.mxu0 %v2506
        %2551 = vmatpush1.bf16.msra.mxu0 %v2505
        %2552 = vmatprep.subr.bf16.mxu0 %v2509
        %2553 = vmatpush1.bf16.msra.mxu0 %v2508
        %2554 = vmatprep.subr.bf16.mxu0 %v2512
        %2555 = vmatpush1.bf16.msra.mxu0 %v2511
        %2556 = vmatprep.subr.bf16.mxu0 %v2515
        %2557 = vmatpush1.bf16.msra.mxu0 %v2514
        %2558 = vmatprep.subr.bf16.mxu0 %v2518
        %2559 = vmatpush1.bf16.msra.mxu0 %v2517
        %2560 = vmatprep.subr.bf16.mxu0 0
        %2561 = vmatpush1.bf16.msra.mxu0 0
        %2562 = vmatprep.subr.bf16.mxu0 0
        %2563 = vmatpush1.bf16.msra.mxu0 0
        %2564 = vmatprep.subr.bf16.mxu0 0
        %2565 = vmatpush1.bf16.msra.mxu0 0
        %2566 = vmatprep.subr.bf16.mxu0 0
        %2567 = vmatpush1.bf16.msra.mxu0 0
        %2568 = vmatprep.subr.bf16.mxu0 0
        %2569 = vmatpush1.bf16.msra.mxu0 0
        %2570 = vmatprep.subr.bf16.mxu0 0
        %2571 = vmatpush1.bf16.msra.mxu0 0
        %2572 = vmatprep.subr.bf16.mxu0 0
        %2573 = vmatpush1.bf16.msra.mxu0 0
        %2574 = vmatprep.subr.bf16.mxu0 0
        %2575 = vmatpush1.bf16.msra.mxu0 0
        %2576 = vmatprep.mubr.bf16.mxu0 0
        %2577 = vmatmul.mubr.bf16.gmra.mrb[0].mxu0 %v2381
        %v2578 = vpop.f32.mrb[0].mxu0
        %v2579 = vadd.f32 0.0, %v2578
        %v2580 = vpop.f32.mrb[0].mxu0
        %v2581 = vadd.f32 0.0, %v2580
        %v2582 = vpop.f32.mrb[0].mxu0
        %v2583 = vpop.f32.mrb[0].mxu0
        %2584 = vdwg.mxu0
        %2585 = vmatprep.subr.bf16.mxu0 0
        %2586 = vmatpush1.bf16.msra.mxu0 %v2498
        %2587 = vmatprep.subr.bf16.mxu0 0
        %2588 = vmatpush1.bf16.msra.mxu0 %v2501
        %2589 = vmatprep.subr.bf16.mxu0 0
        %2590 = vmatpush1.bf16.msra.mxu0 %v2504
        %2591 = vmatprep.subr.bf16.mxu0 0
        %2592 = vmatpush1.bf16.msra.mxu0 %v2507
        %2593 = vmatprep.subr.bf16.mxu0 0
        %2594 = vmatpush1.bf16.msra.mxu0 %v2510
        %2595 = vmatprep.subr.bf16.mxu0 0
        %2596 = vmatpush1.bf16.msra.mxu0 %v2513
        %2597 = vmatprep.subr.bf16.mxu0 0
        %2598 = vmatpush1.bf16.msra.mxu0 %v2516
        %2599 = vmatprep.subr.bf16.mxu0 0
        %2600 = vmatpush1.bf16.msra.mxu0 %v2519
        %2601 = vmatprep.subr.bf16.mxu0 0
        %2602 = vmatpush1.bf16.msra.mxu0 0
        %2603 = vmatprep.subr.bf16.mxu0 0
        %2604 = vmatpush1.bf16.msra.mxu0 0
        %2605 = vmatprep.subr.bf16.mxu0 0
        %2606 = vmatpush1.bf16.msra.mxu0 0
        %2607 = vmatprep.subr.bf16.mxu0 0
        %2608 = vmatpush1.bf16.msra.mxu0 0
        %2609 = vmatprep.subr.bf16.mxu0 0
        %2610 = vmatpush1.bf16.msra.mxu0 0
        %2611 = vmatprep.subr.bf16.mxu0 0
        %2612 = vmatpush1.bf16.msra.mxu0 0
        %2613 = vmatprep.subr.bf16.mxu0 0
        %2614 = vmatpush1.bf16.msra.mxu0 0
        %2615 = vmatprep.subr.bf16.mxu0 0
        %2616 = vmatpush1.bf16.msra.mxu0 0
        %2617 = vmatprep.mubr.bf16.mxu0 0
        %2618 = vmatmul.mubr.bf16.gmra.mrb[0].mxu0 %v2381
        %v2619 = vpop.f32.mrb[0].mxu0
        %v2620 = vadd.f32 0.0, %v2619
        %v2621 = vpop.f32.mrb[0].mxu0
        %v2622 = vpop.f32.mrb[0].mxu0
        %v2623 = vpop.f32.mrb[0].mxu0
        %2624 = vdwg.mxu0
        %v2625 = vpack.c.bf16 %v2383, %v2383
        %v2626 = vld [vmem:[#allocation9] sm:$0xff]
        %v2627 = vld [vmem:[#allocation9 + $0x8] sm:$0xf]
        %v2628 = vld [vmem:[#allocation9 + $0xc] sm:$0xff]
        %v2629 = vld [vmem:[#allocation9 + $0x14] sm:$0xf]
        %v2630 = vld [vmem:[#allocation9 + $0x18] sm:$0xff]
        %v2631 = vld [vmem:[#allocation9 + $0x20] sm:$0xf]
        %v2632 = vld [vmem:[#allocation9 + $0x24] sm:$0xff]
        %v2633 = vld [vmem:[#allocation9 + $0x2c] sm:$0xf]
        %v2634 = vld [vmem:[#allocation9 + $0x30] sm:$0xff]
        %v2635 = vld [vmem:[#allocation9 + $0x38] sm:$0xf]
        %v2636 = vld [vmem:[#allocation9 + $0x3c] sm:$0xff]
        %v2637 = vld [vmem:[#allocation9 + $0x44] sm:$0xf]
        %v2638 = vld [vmem:[#allocation9 + $0x48] sm:$0xff]
        %v2639 = vld [vmem:[#allocation9 + $0x50] sm:$0xf]
        %v2640 = vld [vmem:[#allocation9 + $0x54] sm:$0xff]
        %v2641 = vld [vmem:[#allocation9 + $0x5c] sm:$0xf]
        %v2642 = vld [vmem:[#allocation9 + $0x60] sm:$0xff]
        %v2643 = vld [vmem:[#allocation9 + $0x68] sm:$0xf]
        %v2644 = vld [vmem:[#allocation9 + $0x6c] sm:$0xff]
        %v2645 = vld [vmem:[#allocation9 + $0x74] sm:$0xf]
        %v2646 = vld [vmem:[#allocation9 + $0x78] sm:$0xff]
        %v2647 = vld [vmem:[#allocation9 + $0x80] sm:$0xf]
        %v2648 = vld [vmem:[#allocation9 + $0x84] sm:$0xff]
        %v2649 = vld [vmem:[#allocation9 + $0x8c] sm:$0xf]
        %v2650 = vld [vmem:[#allocation9 + $0x90] sm:$0xff]
        %v2651 = vld [vmem:[#allocation9 + $0x98] sm:$0xf]
        %v2652 = vld [vmem:[#allocation9 + $0x9c] sm:$0xff]
        %v2653 = vld [vmem:[#allocation9 + $0xa4] sm:$0xf]
        %v2654 = vld [vmem:[#allocation9 + $0xa8] sm:$0xff]
        %v2655 = vld [vmem:[#allocation9 + $0xb0] sm:$0xf]
        %v2656 = vld [vmem:[#allocation9 + $0xb4] sm:$0xff]
        %v2657 = vld [vmem:[#allocation9 + $0xbc] sm:$0xf]
        %v2690 = vunpack.c.l.b16 %v2626
        %v2691 = vunpack.c.h.b16 %v2626
        %v2692 = vunpack.c.l.b16 %v2627
        %v2693 = vunpack.c.l.b16 %v2628
        %v2694 = vunpack.c.h.b16 %v2628
        %v2695 = vunpack.c.l.b16 %v2629
        %v2696 = vunpack.c.l.b16 %v2630
        %v2697 = vunpack.c.h.b16 %v2630
        %v2698 = vunpack.c.l.b16 %v2631
        %v2699 = vunpack.c.l.b16 %v2632
        %v2700 = vunpack.c.h.b16 %v2632
        %v2701 = vunpack.c.l.b16 %v2633
        %v2702 = vunpack.c.l.b16 %v2634
        %v2703 = vunpack.c.h.b16 %v2634
        %v2704 = vunpack.c.l.b16 %v2635
        %v2705 = vunpack.c.l.b16 %v2636
        %v2706 = vunpack.c.h.b16 %v2636
        %v2707 = vunpack.c.l.b16 %v2637
        %v2708 = vunpack.c.l.b16 %v2638
        %v2709 = vunpack.c.h.b16 %v2638
        %v2710 = vunpack.c.l.b16 %v2639
        %v2711 = vunpack.c.l.b16 %v2640
        %v2712 = vunpack.c.h.b16 %v2640
        %v2713 = vunpack.c.l.b16 %v2641
        %v2714 = vunpack.c.l.b16 %v2642
        %v2715 = vunpack.c.h.b16 %v2642
        %v2716 = vunpack.c.l.b16 %v2643
        %v2717 = vunpack.c.l.b16 %v2644
        %v2718 = vunpack.c.h.b16 %v2644
        %v2719 = vunpack.c.l.b16 %v2645
        %v2720 = vunpack.c.l.b16 %v2646
        %v2721 = vunpack.c.h.b16 %v2646
        %v2722 = vunpack.c.l.b16 %v2647
        %v2723 = vunpack.c.l.b16 %v2648
        %v2724 = vunpack.c.h.b16 %v2648
        %v2725 = vunpack.c.l.b16 %v2649
        %v2726 = vunpack.c.l.b16 %v2650
        %v2727 = vunpack.c.h.b16 %v2650
        %v2728 = vunpack.c.l.b16 %v2651
        %v2729 = vunpack.c.l.b16 %v2652
        %v2730 = vunpack.c.h.b16 %v2652
        %v2731 = vunpack.c.l.b16 %v2653
        %v2732 = vunpack.c.l.b16 %v2654
        %v2733 = vunpack.c.h.b16 %v2654
        %v2734 = vunpack.c.l.b16 %v2655
        %v2735 = vunpack.c.l.b16 %v2656
        %v2736 = vunpack.c.h.b16 %v2656
        %v2737 = vunpack.c.l.b16 %v2657
        %v2738 = vpack.c.b16 %v2693, %v2690
        %v2739 = vpack.c.b16 %v2694, %v2691
        %v2740 = vpack.c.b16 %v2695, %v2692
        %v2741 = vpack.c.b16 %v2699, %v2696
        %v2742 = vpack.c.b16 %v2700, %v2697
        %v2743 = vpack.c.b16 %v2701, %v2698
        %v2744 = vpack.c.b16 %v2705, %v2702
        %v2745 = vpack.c.b16 %v2706, %v2703
        %v2746 = vpack.c.b16 %v2707, %v2704
        %v2747 = vpack.c.b16 %v2711, %v2708
        %v2748 = vpack.c.b16 %v2712, %v2709
        %v2749 = vpack.c.b16 %v2713, %v2710
        %v2750 = vpack.c.b16 %v2717, %v2714
        %v2751 = vpack.c.b16 %v2718, %v2715
        %v2752 = vpack.c.b16 %v2719, %v2716
        %v2753 = vpack.c.b16 %v2723, %v2720
        %v2754 = vpack.c.b16 %v2724, %v2721
        %v2755 = vpack.c.b16 %v2725, %v2722
        %v2756 = vpack.c.b16 %v2729, %v2726
        %v2757 = vpack.c.b16 %v2730, %v2727
        %v2758 = vpack.c.b16 %v2731, %v2728
        %v2759 = vpack.c.b16 %v2735, %v2732
        %v2760 = vpack.c.b16 %v2736, %v2733
        %v2761 = vpack.c.b16 %v2737, %v2734
        %2786 = vmatprep.subr.bf16.mxu0 %v2739
        %2787 = vmatpush1.bf16.msra.mxu0 %v2738
        %2788 = vmatprep.subr.bf16.mxu0 %v2742
        %2789 = vmatpush1.bf16.msra.mxu0 %v2741
        %2790 = vmatprep.subr.bf16.mxu0 %v2745
        %2791 = vmatpush1.bf16.msra.mxu0 %v2744
        %2792 = vmatprep.subr.bf16.mxu0 %v2748
        %2793 = vmatpush1.bf16.msra.mxu0 %v2747
        %2794 = vmatprep.subr.bf16.mxu0 %v2751
        %2795 = vmatpush1.bf16.msra.mxu0 %v2750
        %2796 = vmatprep.subr.bf16.mxu0 %v2754
        %2797 = vmatpush1.bf16.msra.mxu0 %v2753
        %2798 = vmatprep.subr.bf16.mxu0 %v2757
        %2799 = vmatpush1.bf16.msra.mxu0 %v2756
        %2800 = vmatprep.subr.bf16.mxu0 %v2760
        %2801 = vmatpush1.bf16.msra.mxu0 %v2759
        %2802 = vmatprep.subr.bf16.mxu0 0
        %2803 = vmatpush1.bf16.msra.mxu0 0
        %2804 = vmatprep.subr.bf16.mxu0 0
        %2805 = vmatpush1.bf16.msra.mxu0 0
        %2806 = vmatprep.subr.bf16.mxu0 0
        %2807 = vmatpush1.bf16.msra.mxu0 0
        %2808 = vmatprep.subr.bf16.mxu0 0
        %2809 = vmatpush1.bf16.msra.mxu0 0
        %2810 = vmatprep.subr.bf16.mxu0 0
        %2811 = vmatpush1.bf16.msra.mxu0 0
        %2812 = vmatprep.subr.bf16.mxu0 0
        %2813 = vmatpush1.bf16.msra.mxu0 0
        %2814 = vmatprep.subr.bf16.mxu0 0
        %2815 = vmatpush1.bf16.msra.mxu0 0
        %2816 = vmatprep.subr.bf16.mxu0 0
        %2817 = vmatpush1.bf16.msra.mxu0 0
        %2818 = vmatprep.mubr.bf16.mxu0 0
        %2819 = vmatmul.mubr.bf16.gmra.mrb[0].mxu0 %v2625
        %v2820 = vpop.f32.mrb[0].mxu0
        %v2821 = vadd.f32 0.0, %v2820
        %v2822 = vpop.f32.mrb[0].mxu0
        %v2823 = vadd.f32 0.0, %v2822
        %v2824 = vpop.f32.mrb[0].mxu0
        %v2825 = vpop.f32.mrb[0].mxu0
        %2826 = vdwg.mxu0
        %2827 = vmatprep.subr.bf16.mxu0 0
        %2828 = vmatpush1.bf16.msra.mxu0 %v2740
        %2829 = vmatprep.subr.bf16.mxu0 0
        %2830 = vmatpush1.bf16.msra.mxu0 %v2743
        %2831 = vmatprep.subr.bf16.mxu0 0
        %2832 = vmatpush1.bf16.msra.mxu0 %v2746
        %2833 = vmatprep.subr.bf16.mxu0 0
        %2834 = vmatpush1.bf16.msra.mxu0 %v2749
        %2835 = vmatprep.subr.bf16.mxu0 0
        %2836 = vmatpush1.bf16.msra.mxu0 %v2752
        %2837 = vmatprep.subr.bf16.mxu0 0
        %2838 = vmatpush1.bf16.msra.mxu0 %v2755
        %2839 = vmatprep.subr.bf16.mxu0 0
        %2840 = vmatpush1.bf16.msra.mxu0 %v2758
        %2841 = vmatprep.subr.bf16.mxu0 0
        %2842 = vmatpush1.bf16.msra.mxu0 %v2761
        %2843 = vmatprep.subr.bf16.mxu0 0
        %2844 = vmatpush1.bf16.msra.mxu0 0
        %2845 = vmatprep.subr.bf16.mxu0 0
        %2846 = vmatpush1.bf16.msra.mxu0 0
        %2847 = vmatprep.subr.bf16.mxu0 0
        %2848 = vmatpush1.bf16.msra.mxu0 0
        %2849 = vmatprep.subr.bf16.mxu0 0
        %2850 = vmatpush1.bf16.msra.mxu0 0
        %2851 = vmatprep.subr.bf16.mxu0 0
        %2852 = vmatpush1.bf16.msra.mxu0 0
        %2853 = vmatprep.subr.bf16.mxu0 0
        %2854 = vmatpush1.bf16.msra.mxu0 0
        %2855 = vmatprep.subr.bf16.mxu0 0
        %2856 = vmatpush1.bf16.msra.mxu0 0
        %2857 = vmatprep.subr.bf16.mxu0 0
        %2858 = vmatpush1.bf16.msra.mxu0 0
        %2859 = vmatprep.mubr.bf16.mxu0 0
        %2860 = vmatmul.mubr.bf16.gmra.mrb[0].mxu0 %v2625
        %v2861 = vpop.f32.mrb[0].mxu0
        %v2862 = vadd.f32 0.0, %v2861
        %v2863 = vpop.f32.mrb[0].mxu0
        %v2864 = vpop.f32.mrb[0].mxu0
        %v2865 = vpop.f32.mrb[0].mxu0
        %2866 = vdwg.mxu0
        %s2867 = scalar_lea.vmem %s6, 1
        %v2868 = vld [vmem:[%s2867] ss:$2 sm:$0x3]
        %v2869 = vld [vmem:[%s6 + $0x5] sm:$0x1]
        %v2870 = vld [vmem:[%s6 + $0x7] sm:$0x1]
        %v2871 = vadd.f32 %v2579, %v2821
        %v2872 = vadd.f32 %v2581, %v2823
        %v2874 = vlaneseq
        %v2875 = vshrl.u32 %v2874, 7
        %v2876 = vsub.s32 0, %v2875
        %v2877 = vrot.slane %v2868, %v2876
        %v2878 = vlaneseq
        %v2879 = vshrl.u32 %v2878, 7
        %v2880 = vsub.s32 1, %v2879
        %v2881 = vrot.slane %v2868, %v2880
        %v2884 = vadd.f32 %v2871, %v2877
        %v2885 = vadd.f32 %v2872, %v2881
        %v2886 = vxor.u32 %v2884, 2147483648
        %v2887 = vxor.u32 %v2885, 2147483648
        %v2888 = vmul.f32 %v2886, 1.442695
        %v2889 = vpow.pop %v2888
        %v2890 = vmul.f32 %v2887, 1.442695
        %v2891 = vpow.pop %v2890
        %v2892 = vadd.f32 %v2889, 1.0
        %v2893 = vadd.f32 %v2891, 1.0
        %v2894 = vrcp.pop %v2892
        %v2895 = vmul.f32 1.0, %v2894
        %v2896 = vrcp.pop %v2893
        %v2897 = vmul.f32 1.0, %v2896
        %v2898 = vlaneseq
        %v2899 = vshrl.u32 %v2898, 7
        %v2900 = vsub.s32 0, %v2899
        %v2901 = vrot.slane %v2869, %v2900
        %v2902 = vadd.f32 %v2620, %v2901
        %v2903 = vlaneseq
        %v2904 = vshrl.u32 %v2903, 7
        %v2905 = vsub.s32 0, %v2904
        %v2906 = vrot.slane %v2870, %v2905
        %v2907 = vadd.f32 %v2862, %v2906
        %v2908 = vmul.f32 %v2895, %v2907
        %v2909 = vadd.f32 %v2902, %v2908
        %v2910 = vtanh.pop %v2909
        %v2911 = vsub.f32 1.0, %v2897
        %v2912 = vmul.f32 %v2911, %v2910
        %v2913 = vmul.f32 %v2897, %v2383
        %v2914 = vadd.f32 %v2912, %v2913
        %s2915 = scalar_lea.vmem %s443, 8 [#allocation11]
        %2916 = vst [vmem:[%s2915] sm:$0xff] %v2914
        %v2917 = vld [vmem:[%s7] sm:$0x1]
        %v2919 = vlaneseq
        %v2920 = vshrl.u32 %v2919, 7
        %v2921 = vsub.s32 0, %v2920
        %v2922 = vrot.slane %v2917, %v2921
        %v2924 = vmul.f32 %v2914, %v2922
        %2925 = vadd.xlane.f32.xlu0 %v2924
        %v2926 = vpop.xlane.xlu0 %2925
        %s2927 = sld [smem:[#allocation2]]
        %v2928 = vstv %s2927
        %v2929 = vadd.f32 %v2926, %v2928
        %v2930 = vxor.u32 %v2929, 2147483648
        %v2931 = vmul.f32 %v2930, 1.442695
        %v2932 = vpow.pop %v2931
        %v2933 = vadd.f32 %v2932, 1.0
        %v2934 = vrcp.pop %v2933
        %v2935 = vmul.f32 1.0, %v2934
        %2936 = vst [vmem:[%s452] sm:$0xff] %v2935
        %p2937 = scmp.lt.s32.totalorder %s31, 1
        %s2938 = scalar_select %p2937, %s31, 1
        %s2939 = smul.addr %s2938, 8
        %s2940 = scalar_lea.vmem %s9, %s2939
        %s2941 = sand.u32 %s264, 1
        %s2942 = scalar_lea.sflag [#allocation5], %s2941
        %s2943 = sand.u32 %s264, 1
        %s2944 = smul.addr %s2943, 16
        %s2945 = scalar_lea.vmem [#allocation11], %s2944
        // Predicated region
        $region73: #{wino_forward.1} parent=55 // pred_check
          %p2946 = pneg %p248
        $region74: #{wino_forward.1} parent=55 // pred_check_branch
          %2948 = sbr.rel (%p2946) target = $region76
        $region75: #{wino_forward.1} parent=55 // pred_region
          _
        $region76: #{wino_forward.1} parent=55 // pred_fallthru
          _
        // Predicated region
        $region77: #{wino_forward.1} parent=55 // pred_check
          %p2949 = pneg %p274
        $region78: #{wino_forward.1} parent=55 // pred_check_branch
          %2951 = sbr.rel (%p2949) target = $region80
        $region79: #{wino_forward.1} parent=55 // pred_region
          %s2953 = ssub.s32 256, 256
          %2954 = vsyncadd %s2942, %s2953
          %s2955 = smul.addr %s31, 128
          %s2956 = scalar_lea.hbm %s10, %s2955
          %s2957 = sshll.u32 %s2945, 4
          %s2958 = int_to_ptr.vmem [resolvable:$true] %s2957
          %2963 = dma.vmem_to_hbm [thread:$0]  %s2958, 256, %s2956, %s2942, 128, 256, 8
        $region80: #{wino_forward.1} parent=55 // pred_fallthru
          _
      $region56: #{wino_forward.1} parent=5 // pred_fallthru
        _
      %p2964 = scmp.le.s32.totalorder 2, %s26
      // Predicated region
      $region81: #{wino_forward.1} parent=5 // pred_check
        %p2965 = pneg %p2964
      $region82: #{wino_forward.1} parent=5 // pred_check_branch
        %2967 = sbr.rel (%p2965) target = $region84
      $region83: #{wino_forward.1} parent=5 // pred_region
        %s2968 = ssub.s32 %s26, 2
        // Predicated region
        $region85: #{wino_forward.1} parent=83 // pred_check
          %p2969 = pneg %p254
        $region86: #{wino_forward.1} parent=83 // pred_check_branch
          %2971 = sbr.rel (%p2969) target = $region88
        $region87: #{wino_forward.1} parent=83 // pred_region
          %p2972 = scmp.lt.s32.totalorder %s32, 1
          %s2973 = scalar_select %p2972, %s32, 1
          %s2974 = smul.addr %s2973, 8
          %s2975 = scalar_lea.vmem %s9, %s2974
        $region88: #{wino_forward.1} parent=83 // pred_fallthru
          _
        // Predicated region
        $region89: #{wino_forward.1} parent=83 // pred_check
          %p2976 = pneg %p280
        $region90: #{wino_forward.1} parent=83 // pred_check_branch
          %2978 = sbr.rel (%p2976) target = $region92
        $region91: #{wino_forward.1} parent=83 // pred_region
          %s2979 = sand.u32 %s265, 1
          %s2980 = scalar_lea.sflag [#allocation5], %s2979
          %s2981 = sand.u32 %s265, 1
          %s2982 = smul.addr %s2981, 16
          %s2983 = scalar_lea.vmem [#allocation11], %s2982
          %2984 = dma.done %s2980, 256
        $region92: #{wino_forward.1} parent=83 // pred_fallthru
          _
      $region84: #{wino_forward.1} parent=5 // pred_fallthru
        _
    $region6: #{wino_forward.1} parent=1 // loop_footer
      %s30 = sadd.s32 1, %s26
    $region7: #{wino_forward.1} parent=1 // loop_footer_branch
      %25 = sbr.rel target = $region3
    $region8: #{wino_forward.1} parent=1 // loop_exit
      _
    %2985 = vsyncpa [#allocation4], 1
    %s2986 = scalar_lea.sflag [#allocation4], 1
    %2987 = vsyncpa %s2986, 1
    %2988 = vsyncpa [#allocation7], 1
    %2989 = vsyncpa [#allocation10], 1
    %2990 = vsyncpa [#allocation5], 1
    %s2991 = scalar_lea.sflag [#allocation5], 1
    %2992 = vsyncpa %s2991, 1

</llo_original>
